<compile_context>
chip_gen: v6e
topology: v6e:2x2x1
jax: 0.10.0
libtpu: 0.0.40
codegen_flags: <defaults>
</compile_context>

<pallas_src>
import jax
import jax.numpy as jnp
import numpy as np
from jax.experimental import pallas as pl
from jax.experimental.pallas import tpu as pltpu

HEAD_OUT = 128   # lane-dense packed head-output width (>= 64+64, >= class_count+1)
LANE = 128
F32 = jnp.float32
BF16 = jnp.bfloat16


def _round_up(v, m):
    return (v + m - 1) // m * m


def _lrelu(z):
    # LeakyReLU(negative_slope=0.1)
    return jnp.where(z >= 0, z, 0.1 * z)


# ----------------------------------------------------------------------------
# Fused kernel: all temporal blocks + both multitask heads in one invocation.
# ----------------------------------------------------------------------------
def _make_fused_kernel(Bb, T, K, H, Cpad, layer_cfg, head_cfg):
    M = Bb * T

    def kernel(x_ref, w_ref, b_ref, o_ref, sbuf):
        # Zero the causal halo rows once per grid step (hoisted out of the
        # per-conv path; the halo is never overwritten by the staging stores).
        # Not under pl.when(program_id == 0): with the batch axis marked
        # "parallel" the second TensorCore on v7x never executes step 0.
        if H > 0:
            sbuf[:, 0:H, :] = jnp.zeros((Bb, H, Cpad), BF16)

        def bias_row(i):                       # (1, Cpad) f32
            return b_ref[i:i + 1, :]

        def causal_conv(a_bf, d, P, w_idx, b_idx):
            """(M, Cpad) bf16 -> (M, Cpad) f32 causal dilated conv.

            Stage the activation once at sublane-aligned row H; tap k is the
            static window starting at H - P + k*d whose first rows fall in the
            permanent zero halo (the causal left pad).  K accumulated bf16 dots
            with f32 accumulation replace the K-wide im2col matmul.
            """
            if P > 0:
                sbuf[:, H:H + T, :] = a_bf.reshape(Bb, T, Cpad)
            acc = None
            for k in range(K):
                r0 = H - P + k * d
                if r0 == H:
                    xk = a_bf                  # unshifted tap: skip the VMEM round trip
                else:
                    xk = sbuf[:, r0:r0 + T, :].reshape(M, Cpad)
                pk = jnp.dot(xk, w_ref[w_idx[k]], preferred_element_type=F32)
                acc = pk if acc is None else acc + pk
            return acc + bias_row(b_idx)

        a_bf = x_ref[...].reshape(M, Cpad)     # lane-padded bf16 input
        a_f32 = a_bf.astype(F32)

        for L in layer_cfg:
            d, P = L["d"], L["P"]
            h = _lrelu(causal_conv(a_bf, d, P, L["w1"], L["b1"]))      # conv1+chomp+LReLU
            h = _lrelu(causal_conv(h.astype(BF16), d, P, L["w2"], L["b2"]))
            if L["wds"] >= 0:                                          # 1x1 downsample
                res = jnp.dot(a_bf, w_ref[L["wds"]],
                              preferred_element_type=F32) + bias_row(L["bds"])
            else:
                res = a_f32
            a_f32 = _lrelu(h + res)                                    # residual + LReLU
            a_bf = a_f32.astype(BF16)

        # fused multitask heads: 3 lane-dense block-diagonal matmuls
        z = _lrelu(jnp.dot(a_bf, w_ref[head_cfg["w1"]],
                           preferred_element_type=F32) + bias_row(head_cfg["b1"]))
        z = _lrelu(jnp.dot(z.astype(BF16), w_ref[head_cfg["w2"]],
                           preferred_element_type=F32) + bias_row(head_cfg["b2"]))
        z = jnp.dot(z.astype(BF16), w_ref[head_cfg["w3"]],
                    preferred_element_type=F32) + bias_row(head_cfg["b3"])
        if Cpad > HEAD_OUT:
            z = z[:, :HEAD_OUT]
        o_ref[...] = z.reshape(Bb, T, HEAD_OUT)        # unmasked 128-lane stores

    return kernel


# ----------------------------------------------------------------------------
# Parameter packing: pad every matrix to a (Cpad, Cpad) lane-aligned tile,
# pre-cast to bf16, and concatenate everything into ONE weight slab and ONE
# bias slab (2 DMA descriptors instead of ~20 tiny, padded ones).
# ----------------------------------------------------------------------------
def _pack_params(blocks, heads, K, cin0, class_count):
    cmax = max([HEAD_OUT, cin0]
               + [max(b["w1"].shape[1], b["w1"].shape[2]) for b in blocks])
    Cpad = _round_up(cmax, LANE)

    mats, biases = [], []

    def add_mat(m):
        r, c = m.shape
        mats.append(jnp.zeros((Cpad, Cpad), F32).at[:r, :c].set(m))
        return len(mats) - 1

    def add_bias(b):
        b = jnp.ravel(b)
        biases.append(jnp.zeros((Cpad,), F32).at[:b.shape[0]].set(b))
        return len(biases) - 1

    layer_cfg = []
    for blk in blocks:
        d = int(blk["dilation"])
        P = (K - 1) * d
        layer_cfg.append(dict(
            d=d, P=P,
            w1=[add_mat(blk["w1"][k]) for k in range(K)],
            b1=add_bias(blk["b1"]),
            w2=[add_mat(blk["w2"][k]) for k in range(K)],
            b2=add_bias(blk["b2"]),
            wds=add_mat(blk["wds"]) if "wds" in blk else -1,
            bds=add_bias(blk["bds"]) if "wds" in blk else -1,
        ))

    # --- multitask heads packed into 3 block-diagonal lane-dense layers -----
    wt1, bt1 = heads["wt1"], heads["bt1"]
    wt2, bt2 = heads["wt2"], heads["bt2"]
    wt3, bt3 = heads["wt3"], heads["bt3"]
    wr1, br1 = heads["wr1"], heads["br1"]
    wr2, br2 = heads["wr2"], heads["br2"]
    n1, n2 = wt1.shape[1], wt2.shape[1]
    m1 = wr1.shape[1]
    cc = class_count
    assert n1 + m1 <= HEAD_OUT and n2 + 1 <= HEAD_OUT and cc + 1 <= HEAD_OUT
    # level 1: [fc1_type | fc1_rf] -> LeakyReLU
    w1h = (jnp.zeros((Cpad, Cpad), F32)
           .at[:wt1.shape[0], 0:n1].set(wt1)
           .at[:wr1.shape[0], n1:n1 + m1].set(wr1))
    b1h = jnp.zeros((Cpad,), F32).at[0:n1].set(bt1[0]).at[n1:n1 + m1].set(br1[0])
    # level 2: block-diag [fc2_type ; fc2_rf] -> LeakyReLU (rf output is final)
    w2h = (jnp.zeros((Cpad, Cpad), F32)
           .at[0:n1, 0:n2].set(wt2)
           .at[n1:n1 + m1, n2:n2 + 1].set(wr2))
    b2h = jnp.zeros((Cpad,), F32).at[0:n2].set(bt2[0]).at[n2].set(br2[0, 0])
    # level 3: fc3_type (no activation) + identity pass-through of the rf logit
    w3h = jnp.zeros((Cpad, Cpad), F32).at[0:n2, 0:cc].set(wt3).at[n2, cc].set(1.0)
    b3h = jnp.zeros((Cpad,), F32).at[0:cc].set(bt3[0])

    mats.extend([w1h, w2h, w3h])
    biases.extend([b1h, b2h, b3h])
    head_cfg = dict(w1=len(mats) - 3, w2=len(mats) - 2, w3=len(mats) - 1,
                    b1=len(biases) - 3, b2=len(biases) - 2, b3=len(biases) - 1)

    W = jnp.stack(mats).astype(BF16)          # (NW, Cpad, Cpad) bf16
    Bv = jnp.stack(biases)                    # (NB, Cpad)       f32
    return W, Bv, layer_cfg, head_cfg, Cpad


# ----------------------------------------------------------------------------
# Wrapper
# ----------------------------------------------------------------------------
def forward_pallas(x, blocks, heads, kernel_size, class_count):
    B, T, cin0 = x.shape
    K = kernel_size

    W, Bv, layer_cfg, head_cfg, Cpad = _pack_params(blocks, heads, K, cin0,
                                                    class_count)

    Pmax = max((l["P"] for l in layer_cfg), default=0)
    H = _round_up(Pmax, 16)          # halo rows, 16-aligned (bf16 sublane packing)

    # --- batch-block (matmul M) selection -----------------------------------
    # target M = Bb*T ~ 256 (a multiple of 128 also feeds v5e's 4x128 MXU), but
    # cap Bb at B//2 so the "parallel" grid axis has >= 2 steps (v7x megacore);
    # ragged batch handled with cdiv + zero padding (no B % Bb requirement).
    target_m = 256
    bb = max(1, int(pl.cdiv(target_m, T)))
    if B >= 2:
        bb = min(bb, max(1, B // 2))
    else:
        bb = 1
    while (bb * T) % 8 != 0:         # keep the folded M dim sublane-aligned
        bb += 1
    nb = int(pl.cdiv(B, bb))
    B_pad = nb * bb

    # lane-pad channels, batch-pad to the grid, pre-cast activations to bf16
    x_p = jnp.pad(x, ((0, B_pad - B), (0, 0), (0, Cpad - cin0))).astype(BF16)

    kernel = _make_fused_kernel(bb, T, K, H, Cpad, layer_cfg, head_cfg)

    in_specs = [
        pl.BlockSpec((bb, T, Cpad), lambda i: (i, 0, 0)),
        # Weight/bias slabs are grid-invariant (constant index_map): DMA'd once.
        # TODO(synk): pipeline_mode=pl.Buffered(1) on these two specs would also
        # drop their second (double-buffer) VMEM copy at large channel counts.
        pl.BlockSpec(W.shape, lambda i: (0, 0, 0)),
        pl.BlockSpec(Bv.shape, lambda i: (0, 0)),
    ]
    out_specs = pl.BlockSpec((bb, T, HEAD_OUT), lambda i: (i, 0, 0))

    # explicit VMEM budget (v7x has only 64 MiB physical; default scoped ~32 MiB)
    vmem_need = (2 * bb * T * Cpad * 2            # input block, double-buffered
                 + 2 * bb * T * HEAD_OUT * 4      # output block, double-buffered
                 + 2 * (W.size * 2 + Bv.size * 4)  # weight/bias slabs
                 + bb * (H + T) * Cpad * 2)       # staging scratch
    vmem_limit = int(min(48 * 2**20, max(32 * 2**20, 2 * vmem_need)))

    n_mm = sum(2 * K + (1 if l["wds"] >= 0 else 0) for l in layer_cfg) + 3
    flops = 2 * B_pad * T * Cpad * Cpad * n_mm
    bytes_accessed = (x_p.size * 2 + W.size * 2 + Bv.size * 4
                      + B_pad * T * HEAD_OUT * 4)

    out = pl.pallas_call(
        kernel,
        out_shape=jax.ShapeDtypeStruct((B_pad, T, HEAD_OUT), F32),
        grid=(nb,),
        in_specs=in_specs,
        out_specs=out_specs,
        scratch_shapes=[pltpu.VMEM((bb, H + T, Cpad), BF16)],
        compiler_params=pltpu.CompilerParams(
            dimension_semantics=("parallel",),
            vmem_limit_bytes=vmem_limit),
        cost_estimate=pl.CostEstimate(flops=flops, transcendentals=0,
                                      bytes_accessed=bytes_accessed),
    )(x_p, W, Bv)

    # TODO(synk): for production-scale T, tile T with a receptive-field halo
    # (carried state across T tiles) so per-step blocks fit v7x's 64 MiB VMEM;
    # at T=8 a single full-sequence block is optimal.
    type_logits = out[:B, :, :class_count]
    rf_logits = out[:B, :, class_count:class_count + 1]
    return type_logits, rf_logits


# ----------------------------------------------------------------------------
# Parameter init (deterministic, synthetic) and plain-JAX f32 reference
# ----------------------------------------------------------------------------
def init_params(key, input_size, n_layers, n_channel, class_count, kernel_size):
    keys = jax.random.split(key, 64)
    it = iter(keys)

    def rnd(shape, scale=0.1):
        return scale * jax.random.normal(next(it), shape, F32)

    blocks = []
    for i in range(n_layers):
        cin = input_size if i == 0 else n_channel
        cout = n_channel
        blk = dict(
            w1=rnd((kernel_size, cin, cout)), b1=rnd((1, cout)),
            w2=rnd((kernel_size, cout, cout)), b2=rnd((1, cout)),
            dilation=2 ** i)
        if cin != cout:
            blk["wds"] = rnd((cin, cout))
            blk["bds"] = rnd((1, cout))
        blocks.append(blk)

    heads = dict(
        wt1=rnd((n_channel, 64)), bt1=rnd((1, 64)),
        wt2=rnd((64, 32)), bt2=rnd((1, 32)),
        wt3=rnd((32, class_count)), bt3=rnd((1, class_count)),
        wr1=rnd((n_channel, 64)), br1=rnd((1, 64)),
        wr2=rnd((64, 1)), br2=rnd((1, 1)))
    return blocks, heads


def forward_ref(x, blocks, heads, K):
    h = x
    for blk in blocks:
        d = blk["dilation"]
        P = (K - 1) * d
        T = h.shape[1]

        def cconv(inp, w, b):
            inp_p = jnp.pad(inp, ((0, 0), (P, 0), (0, 0)))
            acc = jnp.zeros((inp.shape[0], T, w.shape[-1]), F32) + b[0]
            for k in range(K):
                acc = acc + jnp.einsum("btc,cd->btd", inp_p[:, k * d:k * d + T, :], w[k])
            return acc

        a = _lrelu(cconv(h, blk["w1"], blk["b1"]))
        o = _lrelu(cconv(a, blk["w2"], blk["b2"]))
        if "wds" in blk:
            res = jnp.einsum("btc,cd->btd", h, blk["wds"]) + blk["bds"][0]
        else:
            res = h
        h = _lrelu(o + res)

    t = _lrelu(h @ heads["wt1"] + heads["bt1"][0])
    t = _lrelu(t @ heads["wt2"] + heads["bt2"][0])
    t = t @ heads["wt3"] + heads["bt3"][0]
    r = _lrelu(h @ heads["wr1"] + heads["br1"][0])
    r = _lrelu(r @ heads["wr2"] + heads["br2"][0])
    return t, r


if __name__ == "__main__":
    # module config
    input_size, n_layers, n_channel = 4, 2, 32
    class_count, kernel_size = 5, 2
    # input config: (batch, seq_len, input_size)
    B, T = 2, 8

    key = jax.random.PRNGKey(0)
    kx, kp = jax.random.split(key)
    x = jax.random.normal(kx, (B, T, input_size), F32)
    blocks, heads = init_params(kp, input_size, n_layers, n_channel,
                                class_count, kernel_size)

    type_logits, rf_logits = forward_pallas(x, blocks, heads, kernel_size,
                                            class_count)
    jax.block_until_ready((type_logits, rf_logits))

    t_ref, r_ref = forward_ref(x, blocks, heads, kernel_size)
    # bf16 MXU matmuls (f32 accumulate) vs f32 reference => loosened tolerances
    np.testing.assert_allclose(np.asarray(type_logits), np.asarray(t_ref),
                               rtol=2e-2, atol=2e-2)
    np.testing.assert_allclose(np.asarray(rf_logits), np.asarray(r_ref),
                               rtol=2e-2, atol=2e-2)
    assert type_logits.shape == (B, T, class_count)
    assert rf_logits.shape == (B, T, 1)
    print("KERNEL_OK")
</pallas_src>

<mosaic_0001>
module attributes {stable_mosaic.version = 11 : i64} {
  func.func @kernel(%arg0: i32, %arg1: memref<1x8x128xbf16, #tpu.memory_space<vmem>>, %arg2: memref<12x128x128xbf16, #tpu.memory_space<vmem>>, %arg3: memref<8x128xf32, #tpu.memory_space<vmem>>, %arg4: memref<1x8x128xf32, #tpu.memory_space<vmem>>, %arg5: memref<1x24x128xbf16, #tpu.memory_space<vmem>>) attributes {dimension_semantics = [#tpu.dimension_semantics<parallel>], iteration_bounds = array<i64: 2>, scalar_prefetch = 0 : i64, scratch_operands = 1 : i64, tpu.core_type = #tpu.core_type<tc>, window_params = [{transform_indices = @transform_0, window_bounds = array<i64: 1, 8, 128>}, {pipeline_mode = #tpu.pipeline_mode<synchronous>, transform_indices = @transform_1, window_bounds = array<i64: 12, 128, 128>}, {pipeline_mode = #tpu.pipeline_mode<synchronous>, transform_indices = @transform_2, window_bounds = array<i64: 8, 128>}, {transform_indices = @transform_3, window_bounds = array<i64: 1, 8, 128>}]} {
    %cst = arith.constant 0.000000e+00 : bf16
    %0 = vector.broadcast %cst : bf16 to vector<1x16x128xbf16>
    %c0 = arith.constant 0 : index
    %c0_0 = arith.constant 0 : index
    %c0_1 = arith.constant 0 : index
    %1 = vector.load %arg5[%c0, %c0_0, %c0_1] : memref<1x24x128xbf16, #tpu.memory_space<vmem>>, vector<1x16x128xbf16>
    tpu.vector_store %arg5[%c0, %c0_0, %c0_1], %0 {strides = array<i32>} : memref<1x24x128xbf16, #tpu.memory_space<vmem>>, vector<1x16x128xbf16>,
    %c0_2 = arith.constant 0 : index
    %c0_3 = arith.constant 0 : index
    %c0_4 = arith.constant 0 : index
    %2 = vector.load %arg1[%c0_2, %c0_3, %c0_4] : memref<1x8x128xbf16, #tpu.memory_space<vmem>>, vector<1x8x128xbf16>
    %3 = vector.shape_cast %2 : vector<1x8x128xbf16> to vector<8x128xbf16>
    %4 = vector.shape_cast %3 : vector<8x128xbf16> to vector<1x8x128xbf16>
    %c0_5 = arith.constant 0 : index
    %c16 = arith.constant 16 : index
    %c0_6 = arith.constant 0 : index
    %5 = vector.load %arg5[%c0_5, %c16, %c0_6] : memref<1x24x128xbf16, #tpu.memory_space<vmem>>, vector<1x8x128xbf16>
    tpu.vector_store %arg5[%c0_5, %c16, %c0_6], %4 {strides = array<i32>} : memref<1x24x128xbf16, #tpu.memory_space<vmem>>, vector<1x8x128xbf16>,
    %c0_7 = arith.constant 0 : index
    %c15 = arith.constant 15 : index
    %c0_8 = arith.constant 0 : index
    %6 = vector.load %arg5[%c0_7, %c15, %c0_8] : memref<1x24x128xbf16, #tpu.memory_space<vmem>>, vector<1x8x128xbf16>
    %7 = vector.shape_cast %6 : vector<1x8x128xbf16> to vector<8x128xbf16>
    %c0_9 = arith.constant 0 : index
    %c0_10 = arith.constant 0 : index
    %c0_11 = arith.constant 0 : index
    %8 = vector.load %arg2[%c0_9, %c0_10, %c0_11] : memref<12x128x128xbf16, #tpu.memory_space<vmem>>, vector<1x128x128xbf16>
    %9 = vector.shape_cast %8 : vector<1x128x128xbf16> to vector<128x128xbf16>
    %cst_12 = arith.constant dense<0.000000e+00> : vector<8x128xf32>
    %10 = tpu.matmul %7, %9, %cst_12 {dimension_numbers = #tpu.dot_dimension_numbers<[1], [0], [0], [1], [0, 0, 1, 1], [], []>} : vector<8x128xbf16>, vector<128x128xbf16>, vector<8x128xf32> -> vector<8x128xf32>
    %c1 = arith.constant 1 : index
    %c0_13 = arith.constant 0 : index
    %c0_14 = arith.constant 0 : index
    %11 = vector.load %arg2[%c1, %c0_13, %c0_14] : memref<12x128x128xbf16, #tpu.memory_space<vmem>>, vector<1x128x128xbf16>
    %12 = vector.shape_cast %11 : vector<1x128x128xbf16> to vector<128x128xbf16>
    %cst_15 = arith.constant dense<0.000000e+00> : vector<8x128xf32>
    %13 = tpu.matmul %3, %12, %cst_15 {dimension_numbers = #tpu.dot_dimension_numbers<[1], [0], [0], [1], [0, 0, 1, 1], [], []>} : vector<8x128xbf16>, vector<128x128xbf16>, vector<8x128xf32> -> vector<8x128xf32>
    %14 = arith.addf %10, %13 : vector<8x128xf32>
    %c0_16 = arith.constant 0 : index
    %c0_17 = arith.constant 0 : index
    %15 = vector.load %arg3[%c0_16, %c0_17] : memref<8x128xf32, #tpu.memory_space<vmem>>, vector<1x128xf32>
    %16 = vector.broadcast %15 : vector<1x128xf32> to vector<8x128xf32>
    %17 = arith.addf %14, %16 : vector<8x128xf32>
    %cst_18 = arith.constant 0.000000e+00 : f32
    %18 = vector.broadcast %cst_18 : f32 to vector<8x128xf32>
    %19 = arith.cmpf oge, %17, %18 : vector<8x128xf32>
    %cst_19 = arith.constant 1.000000e-01 : f32
    %20 = vector.broadcast %cst_19 : f32 to vector<8x128xf32>
    %21 = arith.mulf %20, %17 : vector<8x128xf32>
    %22 = arith.select %19, %17, %21 : vector<8x128xi1>, vector<8x128xf32>
    %23 = arith.truncf %22 : vector<8x128xf32> to vector<8x128xbf16>
    %24 = vector.shape_cast %23 : vector<8x128xbf16> to vector<1x8x128xbf16>
    %c0_20 = arith.constant 0 : index
    %c16_21 = arith.constant 16 : index
    %c0_22 = arith.constant 0 : index
    %25 = vector.load %arg5[%c0_20, %c16_21, %c0_22] : memref<1x24x128xbf16, #tpu.memory_space<vmem>>, vector<1x8x128xbf16>
    tpu.vector_store %arg5[%c0_20, %c16_21, %c0_22], %24 {strides = array<i32>} : memref<1x24x128xbf16, #tpu.memory_space<vmem>>, vector<1x8x128xbf16>,
    %c0_23 = arith.constant 0 : index
    %c15_24 = arith.constant 15 : index
    %c0_25 = arith.constant 0 : index
    %26 = vector.load %arg5[%c0_23, %c15_24, %c0_25] : memref<1x24x128xbf16, #tpu.memory_space<vmem>>, vector<1x8x128xbf16>
    %27 = vector.shape_cast %26 : vector<1x8x128xbf16> to vector<8x128xbf16>
    %c2 = arith.constant 2 : index
    %c0_26 = arith.constant 0 : index
    %c0_27 = arith.constant 0 : index
    %28 = vector.load %arg2[%c2, %c0_26, %c0_27] : memref<12x128x128xbf16, #tpu.memory_space<vmem>>, vector<1x128x128xbf16>
    %29 = vector.shape_cast %28 : vector<1x128x128xbf16> to vector<128x128xbf16>
    %cst_28 = arith.constant dense<0.000000e+00> : vector<8x128xf32>
    %30 = tpu.matmul %27, %29, %cst_28 {dimension_numbers = #tpu.dot_dimension_numbers<[1], [0], [0], [1], [0, 0, 1, 1], [], []>} : vector<8x128xbf16>, vector<128x128xbf16>, vector<8x128xf32> -> vector<8x128xf32>
    %c3 = arith.constant 3 : index
    %c0_29 = arith.constant 0 : index
    %c0_30 = arith.constant 0 : index
    %31 = vector.load %arg2[%c3, %c0_29, %c0_30] : memref<12x128x128xbf16, #tpu.memory_space<vmem>>, vector<1x128x128xbf16>
    %32 = vector.shape_cast %31 : vector<1x128x128xbf16> to vector<128x128xbf16>
    %cst_31 = arith.constant dense<0.000000e+00> : vector<8x128xf32>
    %33 = tpu.matmul %23, %32, %cst_31 {dimension_numbers = #tpu.dot_dimension_numbers<[1], [0], [0], [1], [0, 0, 1, 1], [], []>} : vector<8x128xbf16>, vector<128x128xbf16>, vector<8x128xf32> -> vector<8x128xf32>
    %34 = arith.addf %30, %33 : vector<8x128xf32>
    %c1_32 = arith.constant 1 : index
    %c0_33 = arith.constant 0 : index
    %35 = vector.load %arg3[%c1_32, %c0_33] : memref<8x128xf32, #tpu.memory_space<vmem>>, vector<1x128xf32>
    %36 = vector.broadcast %35 : vector<1x128xf32> to vector<8x128xf32>
    %37 = arith.addf %34, %36 : vector<8x128xf32>
    %cst_34 = arith.constant 0.000000e+00 : f32
    %38 = vector.broadcast %cst_34 : f32 to vector<8x128xf32>
    %39 = arith.cmpf oge, %37, %38 : vector<8x128xf32>
    %cst_35 = arith.constant 1.000000e-01 : f32
    %40 = vector.broadcast %cst_35 : f32 to vector<8x128xf32>
    %41 = arith.mulf %40, %37 : vector<8x128xf32>
    %42 = arith.select %39, %37, %41 : vector<8x128xi1>, vector<8x128xf32>
    %c4 = arith.constant 4 : index
    %c0_36 = arith.constant 0 : index
    %c0_37 = arith.constant 0 : index
    %43 = vector.load %arg2[%c4, %c0_36, %c0_37] : memref<12x128x128xbf16, #tpu.memory_space<vmem>>, vector<1x128x128xbf16>
    %44 = vector.shape_cast %43 : vector<1x128x128xbf16> to vector<128x128xbf16>
    %cst_38 = arith.constant dense<0.000000e+00> : vector<8x128xf32>
    %45 = tpu.matmul %3, %44, %cst_38 {dimension_numbers = #tpu.dot_dimension_numbers<[1], [0], [0], [1], [0, 0, 1, 1], [], []>} : vector<8x128xbf16>, vector<128x128xbf16>, vector<8x128xf32> -> vector<8x128xf32>
    %c2_39 = arith.constant 2 : index
    %c0_40 = arith.constant 0 : index
    %46 = vector.load %arg3[%c2_39, %c0_40] : memref<8x128xf32, #tpu.memory_space<vmem>>, vector<1x128xf32>
    %47 = vector.broadcast %46 : vector<1x128xf32> to vector<8x128xf32>
    %48 = arith.addf %45, %47 : vector<8x128xf32>
    %49 = arith.addf %42, %48 : vector<8x128xf32>
    %cst_41 = arith.constant 0.000000e+00 : f32
    %50 = vector.broadcast %cst_41 : f32 to vector<8x128xf32>
    %51 = arith.cmpf oge, %49, %50 : vector<8x128xf32>
    %cst_42 = arith.constant 1.000000e-01 : f32
    %52 = vector.broadcast %cst_42 : f32 to vector<8x128xf32>
    %53 = arith.mulf %52, %49 : vector<8x128xf32>
    %54 = arith.select %51, %49, %53 : vector<8x128xi1>, vector<8x128xf32>
    %55 = arith.truncf %54 : vector<8x128xf32> to vector<8x128xbf16>
    %56 = vector.shape_cast %55 : vector<8x128xbf16> to vector<1x8x128xbf16>
    %c0_43 = arith.constant 0 : index
    %c16_44 = arith.constant 16 : index
    %c0_45 = arith.constant 0 : index
    %57 = vector.load %arg5[%c0_43, %c16_44, %c0_45] : memref<1x24x128xbf16, #tpu.memory_space<vmem>>, vector<1x8x128xbf16>
    tpu.vector_store %arg5[%c0_43, %c16_44, %c0_45], %56 {strides = array<i32>} : memref<1x24x128xbf16, #tpu.memory_space<vmem>>, vector<1x8x128xbf16>,
    %c0_46 = arith.constant 0 : index
    %c14 = arith.constant 14 : index
    %c0_47 = arith.constant 0 : index
    %58 = vector.load %arg5[%c0_46, %c14, %c0_47] : memref<1x24x128xbf16, #tpu.memory_space<vmem>>, vector<1x8x128xbf16>
    %59 = vector.shape_cast %58 : vector<1x8x128xbf16> to vector<8x128xbf16>
    %c5 = arith.constant 5 : index
    %c0_48 = arith.constant 0 : index
    %c0_49 = arith.constant 0 : index
    %60 = vector.load %arg2[%c5, %c0_48, %c0_49] : memref<12x128x128xbf16, #tpu.memory_space<vmem>>, vector<1x128x128xbf16>
    %61 = vector.shape_cast %60 : vector<1x128x128xbf16> to vector<128x128xbf16>
    %cst_50 = arith.constant dense<0.000000e+00> : vector<8x128xf32>
    %62 = tpu.matmul %59, %61, %cst_50 {dimension_numbers = #tpu.dot_dimension_numbers<[1], [0], [0], [1], [0, 0, 1, 1], [], []>} : vector<8x128xbf16>, vector<128x128xbf16>, vector<8x128xf32> -> vector<8x128xf32>
    %c6 = arith.constant 6 : index
    %c0_51 = arith.constant 0 : index
    %c0_52 = arith.constant 0 : index
    %63 = vector.load %arg2[%c6, %c0_51, %c0_52] : memref<12x128x128xbf16, #tpu.memory_space<vmem>>, vector<1x128x128xbf16>
    %64 = vector.shape_cast %63 : vector<1x128x128xbf16> to vector<128x128xbf16>
    %cst_53 = arith.constant dense<0.000000e+00> : vector<8x128xf32>
    %65 = tpu.matmul %55, %64, %cst_53 {dimension_numbers = #tpu.dot_dimension_numbers<[1], [0], [0], [1], [0, 0, 1, 1], [], []>} : vector<8x128xbf16>, vector<128x128xbf16>, vector<8x128xf32> -> vector<8x128xf32>
    %66 = arith.addf %62, %65 : vector<8x128xf32>
    %c3_54 = arith.constant 3 : index
    %c0_55 = arith.constant 0 : index
    %67 = vector.load %arg3[%c3_54, %c0_55] : memref<8x128xf32, #tpu.memory_space<vmem>>, vector<1x128xf32>
    %68 = vector.broadcast %67 : vector<1x128xf32> to vector<8x128xf32>
    %69 = arith.addf %66, %68 : vector<8x128xf32>
    %cst_56 = arith.constant 0.000000e+00 : f32
    %70 = vector.broadcast %cst_56 : f32 to vector<8x128xf32>
    %71 = arith.cmpf oge, %69, %70 : vector<8x128xf32>
    %cst_57 = arith.constant 1.000000e-01 : f32
    %72 = vector.broadcast %cst_57 : f32 to vector<8x128xf32>
    %73 = arith.mulf %72, %69 : vector<8x128xf32>
    %74 = arith.select %71, %69, %73 : vector<8x128xi1>, vector<8x128xf32>
    %75 = arith.truncf %74 : vector<8x128xf32> to vector<8x128xbf16>
    %76 = vector.shape_cast %75 : vector<8x128xbf16> to vector<1x8x128xbf16>
    %c0_58 = arith.constant 0 : index
    %c16_59 = arith.constant 16 : index
    %c0_60 = arith.constant 0 : index
    %77 = vector.load %arg5[%c0_58, %c16_59, %c0_60] : memref<1x24x128xbf16, #tpu.memory_space<vmem>>, vector<1x8x128xbf16>
    tpu.vector_store %arg5[%c0_58, %c16_59, %c0_60], %76 {strides = array<i32>} : memref<1x24x128xbf16, #tpu.memory_space<vmem>>, vector<1x8x128xbf16>,
    %c0_61 = arith.constant 0 : index
    %c14_62 = arith.constant 14 : index
    %c0_63 = arith.constant 0 : index
    %78 = vector.load %arg5[%c0_61, %c14_62, %c0_63] : memref<1x24x128xbf16, #tpu.memory_space<vmem>>, vector<1x8x128xbf16>
    %79 = vector.shape_cast %78 : vector<1x8x128xbf16> to vector<8x128xbf16>
    %c7 = arith.constant 7 : index
    %c0_64 = arith.constant 0 : index
    %c0_65 = arith.constant 0 : index
    %80 = vector.load %arg2[%c7, %c0_64, %c0_65] : memref<12x128x128xbf16, #tpu.memory_space<vmem>>, vector<1x128x128xbf16>
    %81 = vector.shape_cast %80 : vector<1x128x128xbf16> to vector<128x128xbf16>
    %cst_66 = arith.constant dense<0.000000e+00> : vector<8x128xf32>
    %82 = tpu.matmul %79, %81, %cst_66 {dimension_numbers = #tpu.dot_dimension_numbers<[1], [0], [0], [1], [0, 0, 1, 1], [], []>} : vector<8x128xbf16>, vector<128x128xbf16>, vector<8x128xf32> -> vector<8x128xf32>
    %c8 = arith.constant 8 : index
    %c0_67 = arith.constant 0 : index
    %c0_68 = arith.constant 0 : index
    %83 = vector.load %arg2[%c8, %c0_67, %c0_68] : memref<12x128x128xbf16, #tpu.memory_space<vmem>>, vector<1x128x128xbf16>
    %84 = vector.shape_cast %83 : vector<1x128x128xbf16> to vector<128x128xbf16>
    %cst_69 = arith.constant dense<0.000000e+00> : vector<8x128xf32>
    %85 = tpu.matmul %75, %84, %cst_69 {dimension_numbers = #tpu.dot_dimension_numbers<[1], [0], [0], [1], [0, 0, 1, 1], [], []>} : vector<8x128xbf16>, vector<128x128xbf16>, vector<8x128xf32> -> vector<8x128xf32>
    %86 = arith.addf %82, %85 : vector<8x128xf32>
    %c4_70 = arith.constant 4 : index
    %c0_71 = arith.constant 0 : index
    %87 = vector.load %arg3[%c4_70, %c0_71] : memref<8x128xf32, #tpu.memory_space<vmem>>, vector<1x128xf32>
    %88 = vector.broadcast %87 : vector<1x128xf32> to vector<8x128xf32>
    %89 = arith.addf %86, %88 : vector<8x128xf32>
    %cst_72 = arith.constant 0.000000e+00 : f32
    %90 = vector.broadcast %cst_72 : f32 to vector<8x128xf32>
    %91 = arith.cmpf oge, %89, %90 : vector<8x128xf32>
    %cst_73 = arith.constant 1.000000e-01 : f32
    %92 = vector.broadcast %cst_73 : f32 to vector<8x128xf32>
    %93 = arith.mulf %92, %89 : vector<8x128xf32>
    %94 = arith.select %91, %89, %93 : vector<8x128xi1>, vector<8x128xf32>
    %95 = arith.addf %94, %54 : vector<8x128xf32>
    %cst_74 = arith.constant 0.000000e+00 : f32
    %96 = vector.broadcast %cst_74 : f32 to vector<8x128xf32>
    %97 = arith.cmpf oge, %95, %96 : vector<8x128xf32>
    %cst_75 = arith.constant 1.000000e-01 : f32
    %98 = vector.broadcast %cst_75 : f32 to vector<8x128xf32>
    %99 = arith.mulf %98, %95 : vector<8x128xf32>
    %100 = arith.select %97, %95, %99 : vector<8x128xi1>, vector<8x128xf32>
    %101 = arith.truncf %100 : vector<8x128xf32> to vector<8x128xbf16>
    %c9 = arith.constant 9 : index
    %c0_76 = arith.constant 0 : index
    %c0_77 = arith.constant 0 : index
    %102 = vector.load %arg2[%c9, %c0_76, %c0_77] : memref<12x128x128xbf16, #tpu.memory_space<vmem>>, vector<1x128x128xbf16>
    %103 = vector.shape_cast %102 : vector<1x128x128xbf16> to vector<128x128xbf16>
    %cst_78 = arith.constant dense<0.000000e+00> : vector<8x128xf32>
    %104 = tpu.matmul %101, %103, %cst_78 {dimension_numbers = #tpu.dot_dimension_numbers<[1], [0], [0], [1], [0, 0, 1, 1], [], []>} : vector<8x128xbf16>, vector<128x128xbf16>, vector<8x128xf32> -> vector<8x128xf32>
    %c5_79 = arith.constant 5 : index
    %c0_80 = arith.constant 0 : index
    %105 = vector.load %arg3[%c5_79, %c0_80] : memref<8x128xf32, #tpu.memory_space<vmem>>, vector<1x128xf32>
    %106 = vector.broadcast %105 : vector<1x128xf32> to vector<8x128xf32>
    %107 = arith.addf %104, %106 : vector<8x128xf32>
    %cst_81 = arith.constant 0.000000e+00 : f32
    %108 = vector.broadcast %cst_81 : f32 to vector<8x128xf32>
    %109 = arith.cmpf oge, %107, %108 : vector<8x128xf32>
    %cst_82 = arith.constant 1.000000e-01 : f32
    %110 = vector.broadcast %cst_82 : f32 to vector<8x128xf32>
    %111 = arith.mulf %110, %107 : vector<8x128xf32>
    %112 = arith.select %109, %107, %111 : vector<8x128xi1>, vector<8x128xf32>
    %113 = arith.truncf %112 : vector<8x128xf32> to vector<8x128xbf16>
    %c10 = arith.constant 10 : index
    %c0_83 = arith.constant 0 : index
    %c0_84 = arith.constant 0 : index
    %114 = vector.load %arg2[%c10, %c0_83, %c0_84] : memref<12x128x128xbf16, #tpu.memory_space<vmem>>, vector<1x128x128xbf16>
    %115 = vector.shape_cast %114 : vector<1x128x128xbf16> to vector<128x128xbf16>
    %cst_85 = arith.constant dense<0.000000e+00> : vector<8x128xf32>
    %116 = tpu.matmul %113, %115, %cst_85 {dimension_numbers = #tpu.dot_dimension_numbers<[1], [0], [0], [1], [0, 0, 1, 1], [], []>} : vector<8x128xbf16>, vector<128x128xbf16>, vector<8x128xf32> -> vector<8x128xf32>
    %c6_86 = arith.constant 6 : index
    %c0_87 = arith.constant 0 : index
    %117 = vector.load %arg3[%c6_86, %c0_87] : memref<8x128xf32, #tpu.memory_space<vmem>>, vector<1x128xf32>
    %118 = vector.broadcast %117 : vector<1x128xf32> to vector<8x128xf32>
    %119 = arith.addf %116, %118 : vector<8x128xf32>
    %cst_88 = arith.constant 0.000000e+00 : f32
    %120 = vector.broadcast %cst_88 : f32 to vector<8x128xf32>
    %121 = arith.cmpf oge, %119, %120 : vector<8x128xf32>
    %cst_89 = arith.constant 1.000000e-01 : f32
    %122 = vector.broadcast %cst_89 : f32 to vector<8x128xf32>
    %123 = arith.mulf %122, %119 : vector<8x128xf32>
    %124 = arith.select %121, %119, %123 : vector<8x128xi1>, vector<8x128xf32>
    %125 = arith.truncf %124 : vector<8x128xf32> to vector<8x128xbf16>
    %c11 = arith.constant 11 : index
    %c0_90 = arith.constant 0 : index
    %c0_91 = arith.constant 0 : index
    %126 = vector.load %arg2[%c11, %c0_90, %c0_91] : memref<12x128x128xbf16, #tpu.memory_space<vmem>>, vector<1x128x128xbf16>
    %127 = vector.shape_cast %126 : vector<1x128x128xbf16> to vector<128x128xbf16>
    %cst_92 = arith.constant dense<0.000000e+00> : vector<8x128xf32>
    %128 = tpu.matmul %125, %127, %cst_92 {dimension_numbers = #tpu.dot_dimension_numbers<[1], [0], [0], [1], [0, 0, 1, 1], [], []>} : vector<8x128xbf16>, vector<128x128xbf16>, vector<8x128xf32> -> vector<8x128xf32>
    %c7_93 = arith.constant 7 : index
    %c0_94 = arith.constant 0 : index
    %129 = vector.load %arg3[%c7_93, %c0_94] : memref<8x128xf32, #tpu.memory_space<vmem>>, vector<1x128xf32>
    %130 = vector.broadcast %129 : vector<1x128xf32> to vector<8x128xf32>
    %131 = arith.addf %128, %130 : vector<8x128xf32>
    %132 = vector.shape_cast %131 : vector<8x128xf32> to vector<1x8x128xf32>
    %c0_95 = arith.constant 0 : index
    %c0_96 = arith.constant 0 : index
    %c0_97 = arith.constant 0 : index
    %133 = vector.load %arg4[%c0_95, %c0_96, %c0_97] : memref<1x8x128xf32, #tpu.memory_space<vmem>>, vector<1x8x128xf32>
    tpu.vector_store %arg4[%c0_95, %c0_96, %c0_97], %132 {strides = array<i32>} : memref<1x8x128xf32, #tpu.memory_space<vmem>>, vector<1x8x128xf32>,
    return
  }
  func.func @transform_0(%arg0: i32) -> (i32, i32, i32) {
    %c0_i32 = arith.constant 0 : i32
    %c0_i32_0 = arith.constant 0 : i32
    %c0_i32_1 = arith.constant 0 : i32
    return %arg0, %c0_i32, %c0_i32_0 : i32, i32, i32
  }
  func.func @transform_1(%arg0: i32) -> (i32, i32, i32) {
    %c0_i32 = arith.constant 0 : i32
    %c0_i32_0 = arith.constant 0 : i32
    %c0_i32_1 = arith.constant 0 : i32
    %c0_i32_2 = arith.constant 0 : i32
    return %c0_i32, %c0_i32_0, %c0_i32_1 : i32, i32, i32
  }
  func.func @transform_2(%arg0: i32) -> (i32, i32) {
    %c0_i32 = arith.constant 0 : i32
    %c0_i32_0 = arith.constant 0 : i32
    %c0_i32_1 = arith.constant 0 : i32
    return %c0_i32, %c0_i32_0 : i32, i32
  }
  func.func @transform_3(%arg0: i32) -> (i32, i32, i32) {
    %c0_i32 = arith.constant 0 : i32
    %c0_i32_0 = arith.constant 0 : i32
    %c0_i32_1 = arith.constant 0 : i32
    return %arg0, %c0_i32, %c0_i32_0 : i32, i32, i32
  }
}

</mosaic_0001>

<llo_original>
// kernel: tpu_custom_call.1
$region0: #{tpu_custom_call.1}
  #allocation0 [shape = 'u32[]', space=smem, size = 0x4, offset = 0x4, fixed_abs, tag = 'smem constant byte address 0x4 - core index']
  #allocation1 [shape = 'u32[144,128]{1,0:T(1,128)}', space=vmem, size = 0x12000, scoped, tag = 'internal scratch']
  #allocation2 [shape = 'bf16[1,24,128]{2,1,0:T(8,128)(2,1)}', space=vmem, size = 0x1800, scoped, tag = 'scratch operand']
  %s0 = inlined_call_operand.hbm [shape: bf16[2,8,128], index: 0, kind: input, shape index: {}]
  %s1 = inlined_call_operand.hbm [shape: bf16[12,128,128], index: 1, kind: input, shape index: {}]
  %s2 = inlined_call_operand.hbm [shape: f32[8,128], index: 2, kind: input, shape index: {}]
  %s3 = inlined_call_operand.hbm [shape: f32[2,8,128], index: 3, kind: output, shape index: {}]
  %s4 = sld [smem:[#allocation0]]
  $region57: #{tpu_custom_call.1} parent=0
    _
  %s6 = ssub.s32 1, %s4
  %s7 = scalar_select 0, %s6, %s4
  $region1: #{tpu_custom_call.1} parent=0
    #allocation3 [shape = 'u8[4096]{0}', space=vmem, size = 0x1000, scoped, tag = 'input window, operand 0']
    #allocation4 [shape = 's32[2]{0}', space=sflag, size = 0x8, scoped, tag = 'scoped memory for tpu_custom_call.1']
    #allocation5 [shape = 's32[2]{0}', space=sflag, size = 0x8, scoped, tag = 'scoped memory for tpu_custom_call.1']
    #allocation6 [shape = 'u8[393216]{0}', space=vmem, size = 0x60000, scoped, tag = 'input window, operand 1, single buffered']
    #allocation7 [shape = 's32[1]{0}', space=sflag, size = 0x4, scoped, tag = 'scoped memory for tpu_custom_call.1']
    #allocation8 [shape = 'u8[4096]{0}', space=vmem, size = 0x1000, scoped, tag = 'input window, operand 2, single buffered']
    #allocation9 [shape = 'u8[8192]{0}', space=vmem, size = 0x2000, scoped, tag = 'output window, operand 0']
    %8 = vsyncpa [#allocation4], 0
    %s9 = scalar_lea.sflag [#allocation4], 1
    %10 = vsyncpa %s9, 0
    %11 = vsyncpa [#allocation7], 0
    %12 = vsyncpa [#allocation5], 0
    %s13 = scalar_lea.sflag [#allocation5], 1
    %14 = vsyncpa %s13, 0
    loop: start=0, step=1, limit=4
    $region2: #{tpu_custom_call.1} parent=1 // loop_pre_header
      _
    $region3: #{tpu_custom_call.1} parent=1 // loop_header
      %s16 = sphi 0, %s20
      %p17 = scmp.ge.s32.totalorder %s16, 4
      %s26 = sphi 0, %s28
      %s29 = sphi 0, %s26
      %s30 = sphi 0, %s29
      %s46 = sphi 0, %s30
      %s50 = sphi 0, %s50
      %s52 = sphi 0, %s50
      %s53 = sphi 0, %s52
      %s67 = sphi 0, %s53
      %s71 = sphi 0, %s71
      %s73 = sphi 0, %s71
      %s74 = sphi 0, %s73
      %s88 = sphi 0, %s74
      %s94 = sphi 0, %s96
      %s97 = sphi 0, %s94
      %s98 = sphi 0, %s97
      %s114 = sphi 0, %s98
    $region4: #{tpu_custom_call.1} parent=1 // loop_header_branch
      %19 = sbr.rel (%p17) target = $region8
    $region5: #{tpu_custom_call.1} parent=1 // loop_body
      %s21 = ssub.s32 %s16, 1
      %s22 = ssub.s32 %s16, 2
      %s23 = sadd.s32 %s16, 1
      %s24 = ssub.s32 %s16, %s23
      %p25 = scmp.eq.s32.totalorder %s24, 0
      %s27 = sadd.s32 %s26, 1
      %s28 = scalar_select %p25, %s26, %s27
      %p31 = pneg %p25
      %p32 = scmp.eq.s32.totalorder %s16, 1
      %p33 = por %p31, %p32
      %p34 = scmp.ne.s32.totalorder %s26, %s29
      %p35 = scmp.eq.s32.totalorder %s16, 0
      %p36 = por %p34, %p35
      %p37 = scmp.ne.s32.totalorder %s26, %s29
      %p38 = scmp.eq.s32.totalorder %s21, 1
      %p39 = por %p37, %p38
      %p40 = scmp.ne.s32.totalorder %s29, %s30
      %p41 = scmp.eq.s32.totalorder %s21, 0
      %p42 = por %p40, %p41
      %p43 = scmp.ne.s32.totalorder %s29, %s30
      %p44 = scmp.eq.s32.totalorder %s22, 1
      %p45 = por %p43, %p44
      %p47 = scmp.ne.s32.totalorder %s30, %s46
      %p48 = scmp.eq.s32.totalorder %s22, 0
      %p49 = por %p47, %p48
      %s51 = sadd.s32 %s50, 1
      %p54 = scmp.eq.s32.totalorder %s16, 1
      %p55 = scmp.ne.s32.totalorder %s50, %s52
      %p56 = scmp.eq.s32.totalorder %s16, 0
      %p57 = por %p55, %p56
      %p58 = scmp.ne.s32.totalorder %s50, %s52
      %p59 = scmp.eq.s32.totalorder %s21, 1
      %p60 = por %p58, %p59
      %p61 = scmp.ne.s32.totalorder %s52, %s53
      %p62 = scmp.eq.s32.totalorder %s21, 0
      %p63 = por %p61, %p62
      %p64 = scmp.ne.s32.totalorder %s52, %s53
      %p65 = scmp.eq.s32.totalorder %s22, 1
      %p66 = por %p64, %p65
      %p68 = scmp.ne.s32.totalorder %s53, %s67
      %p69 = scmp.eq.s32.totalorder %s22, 0
      %p70 = por %p68, %p69
      %s72 = sadd.s32 %s71, 1
      %p75 = scmp.eq.s32.totalorder %s16, 1
      %p76 = scmp.ne.s32.totalorder %s71, %s73
      %p77 = scmp.eq.s32.totalorder %s16, 0
      %p78 = por %p76, %p77
      %p79 = scmp.ne.s32.totalorder %s71, %s73
      %p80 = scmp.eq.s32.totalorder %s21, 1
      %p81 = por %p79, %p80
      %p82 = scmp.ne.s32.totalorder %s73, %s74
      %p83 = scmp.eq.s32.totalorder %s21, 0
      %p84 = por %p82, %p83
      %p85 = scmp.ne.s32.totalorder %s73, %s74
      %p86 = scmp.eq.s32.totalorder %s22, 1
      %p87 = por %p85, %p86
      %p89 = scmp.ne.s32.totalorder %s74, %s88
      %p90 = scmp.eq.s32.totalorder %s22, 0
      %p91 = por %p89, %p90
      %s92 = ssub.s32 %s16, %s23
      %p93 = scmp.eq.s32.totalorder %s92, 0
      %s95 = sadd.s32 %s94, 1
      %s96 = scalar_select %p93, %s94, %s95
      %p99 = pneg %p93
      %p100 = scmp.eq.s32.totalorder %s16, 1
      %p101 = por %p99, %p100
      %p102 = scmp.ne.s32.totalorder %s94, %s97
      %p103 = scmp.eq.s32.totalorder %s16, 0
      %p104 = por %p102, %p103
      %p105 = scmp.ne.s32.totalorder %s94, %s97
      %p106 = scmp.eq.s32.totalorder %s21, 1
      %p107 = por %p105, %p106
      %p108 = scmp.ne.s32.totalorder %s97, %s98
      %p109 = scmp.eq.s32.totalorder %s21, 0
      %p110 = por %p108, %p109
      %p111 = scmp.ne.s32.totalorder %s97, %s98
      %p112 = scmp.eq.s32.totalorder %s22, 1
      %p113 = por %p111, %p112
      %p115 = scmp.ne.s32.totalorder %s98, %s114
      %p116 = scmp.eq.s32.totalorder %s22, 0
      %p117 = por %p115, %p116
      %p118 = scmp.le.s32.totalorder 1, %s16
      %p119 = scmp.lt.s32.totalorder %s16, 3
      %p120 = pnand %p118, %p119
      %p121 = pneg %p120
      // Predicated region
      $region9: #{tpu_custom_call.1} parent=5 // pred_check
        _
      $region10: #{tpu_custom_call.1} parent=5 // pred_check_branch
        %123 = sbr.rel (%p120) target = $region12
      $region11: #{tpu_custom_call.1} parent=5 // pred_region
        %s124 = ssub.s32 %s16, 1
        // Predicated region
        $region13: #{tpu_custom_call.1} parent=11 // pred_check
          %p125 = pneg %p63
        $region14: #{tpu_custom_call.1} parent=11 // pred_check_branch
          %127 = sbr.rel (%p125) target = $region16
        $region15: #{tpu_custom_call.1} parent=11 // pred_region
          %s129 = ssub.s32 12288, 12288
          %130 = vsyncadd [#allocation7], %s129
          %s131 = sshll.u32 [#allocation6], 4
          %s132 = int_to_ptr.vmem [resolvable:$true] %s131
          %137 = dma.hbm_to_vmem [thread:$0]  %s1, 12288, %s132, [#allocation7], 64, 64, 4
        $region16: #{tpu_custom_call.1} parent=11 // pred_fallthru
          _
        // Predicated region
        $region17: #{tpu_custom_call.1} parent=11 // pred_check
          %p138 = pneg %p84
        $region18: #{tpu_custom_call.1} parent=11 // pred_check_branch
          %140 = sbr.rel (%p138) target = $region20
        $region19: #{tpu_custom_call.1} parent=11 // pred_region
          %s142 = ssub.s32 128, 128
          %143 = vsyncadd [#allocation7], %s142
          %s145 = sshll.u32 [#allocation8], 4
          %s146 = int_to_ptr.vmem [resolvable:$true] %s145
          %148 = dma.hbm_to_vmem [thread:$0]  %s2, 128, %s146, [#allocation7]
        $region20: #{tpu_custom_call.1} parent=11 // pred_fallthru
          _
      $region12: #{tpu_custom_call.1} parent=5 // pred_fallthru
        _
      %p149 = scmp.lt.s32.totalorder %s16, 2
      // Predicated region
      $region21: #{tpu_custom_call.1} parent=5 // pred_check
        %p150 = pneg %p149
      $region22: #{tpu_custom_call.1} parent=5 // pred_check_branch
        %152 = sbr.rel (%p150) target = $region24
      $region23: #{tpu_custom_call.1} parent=5 // pred_region
        // Predicated region
        $region25: #{tpu_custom_call.1} parent=23 // pred_check
          %p153 = pneg %p36
        $region26: #{tpu_custom_call.1} parent=23 // pred_check_branch
          %155 = sbr.rel (%p153) target = $region28
        $region27: #{tpu_custom_call.1} parent=23 // pred_region
          %s156 = sand.u32 %s26, 1
          %s157 = scalar_lea.sflag [#allocation4], %s156
          %s158 = sand.u32 %s26, 1
          %s159 = smul.addr %s158, 4
          %s160 = scalar_lea.vmem [#allocation3], %s159
          %s162 = ssub.s32 64, 64
          %163 = vsyncadd %s157, %s162
          %s164 = smul.addr %s16, 64
          %s165 = scalar_lea.hbm %s0, %s164
          %s167 = sshll.u32 %s160, 4
          %s168 = int_to_ptr.vmem [resolvable:$true] %s167
          %170 = dma.hbm_to_vmem [thread:$0]  %s165, 64, %s168, %s157
        $region28: #{tpu_custom_call.1} parent=23 // pred_fallthru
          _
      $region24: #{tpu_custom_call.1} parent=5 // pred_fallthru
        _
      %p171 = scmp.le.s32.totalorder 1, %s16
      %p172 = scmp.lt.s32.totalorder %s16, 3
      %p173 = pnand %p171, %p172
      %p174 = pneg %p173
      // Predicated region
      $region29: #{tpu_custom_call.1} parent=5 // pred_check
        _
      $region30: #{tpu_custom_call.1} parent=5 // pred_check_branch
        %176 = sbr.rel (%p173) target = $region32
      $region31: #{tpu_custom_call.1} parent=5 // pred_region
        %s177 = ssub.s32 %s16, 1
        %s178 = sand.u32 %s29, 1
        %s179 = scalar_lea.sflag [#allocation4], %s178
        %s180 = sand.u32 %s29, 1
        %s181 = smul.addr %s180, 4
        %s182 = scalar_lea.vmem [#allocation3], %s181
        // Predicated region
        $region33: #{tpu_custom_call.1} parent=31 // pred_check
          %p183 = pneg %p42
        $region34: #{tpu_custom_call.1} parent=31 // pred_check_branch
          %185 = sbr.rel (%p183) target = $region36
        $region35: #{tpu_custom_call.1} parent=31 // pred_region
          %186 = dma.done %s179, 64
        $region36: #{tpu_custom_call.1} parent=31 // pred_fallthru
          _
        // Predicated region
        $region37: #{tpu_custom_call.1} parent=31 // pred_check
          %p187 = pneg %p63
        $region38: #{tpu_custom_call.1} parent=31 // pred_check_branch
          %189 = sbr.rel (%p187) target = $region40
        $region39: #{tpu_custom_call.1} parent=31 // pred_region
          %190 = dma.done [#allocation7], 12288
        $region40: #{tpu_custom_call.1} parent=31 // pred_fallthru
          _
        // Predicated region
        $region41: #{tpu_custom_call.1} parent=31 // pred_check
          %p191 = pneg %p84
        $region42: #{tpu_custom_call.1} parent=31 // pred_check_branch
          %193 = sbr.rel (%p191) target = $region44
        $region43: #{tpu_custom_call.1} parent=31 // pred_region
          %194 = dma.done [#allocation7], 128
        $region44: #{tpu_custom_call.1} parent=31 // pred_fallthru
          _
        %s195 = sand.u32 %s29, 1
        %s196 = scalar_lea.sflag [#allocation4], %s195
        %s197 = sand.u32 %s29, 1
        %s198 = smul.addr %s197, 4
        %s199 = scalar_lea.vmem [#allocation3], %s198
        %p200 = pneg %p42
        %p201 = pneg %p39
        %p202 = pneg %p63
        %p203 = pneg %p60
        %p204 = pneg %p84
        %p205 = pneg %p81
        %p206 = pneg %p110
        %p207 = pneg %p107
        %s208 = sand.u32 %s97, 1
        %s209 = scalar_lea.sflag [#allocation5], %s208
        %s210 = sand.u32 %s97, 1
        %s211 = smul.addr %s210, 8
        %s212 = scalar_lea.vmem [#allocation9], %s211
        %214 = vst [vmem:[#allocation2] sm:$0xf] 0
        %215 = vst [vmem:[#allocation2 + $0x4] sm:$0xf] 0
        %v216 = vld [vmem:[%s182] sm:$0xf]
        %217 = vst [vmem:[#allocation2 + $0x8] sm:$0xf] %v216
        %v218 = vld [vmem:[#allocation2 + $0x4] sm:$0x8]
        %v219 = vld [vmem:[#allocation2 + $0x8] sm:$0xf]
        %v220 = vld [vmem:[#allocation6] sm:$0xf]
        %v221 = vld [vmem:[#allocation6 + $0x4] sm:$0xf]
        %v222 = vld [vmem:[#allocation6 + $0x8] sm:$0xf]
        %v223 = vld [vmem:[#allocation6 + $0xc] sm:$0xf]
        %v224 = vld [vmem:[#allocation6 + $0x10] sm:$0xf]
        %v225 = vld [vmem:[#allocation6 + $0x14] sm:$0xf]
        %v226 = vld [vmem:[#allocation6 + $0x18] sm:$0xf]
        %v227 = vld [vmem:[#allocation6 + $0x1c] sm:$0xf]
        %v228 = vld [vmem:[#allocation6 + $0x20] sm:$0xf]
        %v229 = vld [vmem:[#allocation6 + $0x24] sm:$0xf]
        %v230 = vld [vmem:[#allocation6 + $0x28] sm:$0xf]
        %v231 = vld [vmem:[#allocation6 + $0x2c] sm:$0xf]
        %v232 = vld [vmem:[#allocation6 + $0x30] sm:$0xf]
        %v233 = vld [vmem:[#allocation6 + $0x34] sm:$0xf]
        %v234 = vld [vmem:[#allocation6 + $0x38] sm:$0xf]
        %v235 = vld [vmem:[#allocation6 + $0x3c] sm:$0xf]
        %s236 = scalar_lea.vmem [#allocation6], 64
        %v237 = vld [vmem:[%s236] sm:$0xf]
        %v238 = vld [vmem:[%s236 + $0x4] sm:$0xf]
        %v239 = vld [vmem:[%s236 + $0x8] sm:$0xf]
        %v240 = vld [vmem:[%s236 + $0xc] sm:$0xf]
        %v241 = vld [vmem:[%s236 + $0x10] sm:$0xf]
        %v242 = vld [vmem:[%s236 + $0x14] sm:$0xf]
        %v243 = vld [vmem:[%s236 + $0x18] sm:$0xf]
        %v244 = vld [vmem:[%s236 + $0x1c] sm:$0xf]
        %v245 = vld [vmem:[%s236 + $0x20] sm:$0xf]
        %v246 = vld [vmem:[%s236 + $0x24] sm:$0xf]
        %v247 = vld [vmem:[%s236 + $0x28] sm:$0xf]
        %v248 = vld [vmem:[%s236 + $0x2c] sm:$0xf]
        %v249 = vld [vmem:[%s236 + $0x30] sm:$0xf]
        %v250 = vld [vmem:[%s236 + $0x34] sm:$0xf]
        %v251 = vld [vmem:[%s236 + $0x38] sm:$0xf]
        %v252 = vld [vmem:[%s236 + $0x3c] sm:$0xf]
        %v269 = vunpack.c.l.b16 %v237
        %v270 = vunpack.c.l.b16 %v238
        %v271 = vunpack.c.l.b16 %v239
        %v272 = vunpack.c.l.b16 %v240
        %v273 = vunpack.c.l.b16 %v241
        %v274 = vunpack.c.l.b16 %v242
        %v275 = vunpack.c.l.b16 %v243
        %v276 = vunpack.c.l.b16 %v244
        %v277 = vunpack.c.l.b16 %v245
        %v278 = vunpack.c.l.b16 %v246
        %v279 = vunpack.c.l.b16 %v247
        %v280 = vunpack.c.l.b16 %v248
        %v281 = vunpack.c.l.b16 %v249
        %v282 = vunpack.c.l.b16 %v250
        %v283 = vunpack.c.l.b16 %v251
        %v284 = vunpack.c.l.b16 %v252
        %v285 = vpack.c.b16 %v270, %v269
        %v286 = vpack.c.b16 %v272, %v271
        %v287 = vpack.c.b16 %v274, %v273
        %v288 = vpack.c.b16 %v276, %v275
        %v289 = vpack.c.b16 %v278, %v277
        %v290 = vpack.c.b16 %v280, %v279
        %v291 = vpack.c.b16 %v282, %v281
        %v292 = vpack.c.b16 %v284, %v283
        %301 = vmatprep.subr.bf16.mxu0 0
        %302 = vmatpush1.bf16.msra.mxu0 %v292
        %303 = vmatprep.subr.bf16.mxu0 0
        %304 = vmatpush1.bf16.msra.mxu0 %v291
        %305 = vmatprep.subr.bf16.mxu0 0
        %306 = vmatpush1.bf16.msra.mxu0 %v290
        %307 = vmatprep.subr.bf16.mxu0 0
        %308 = vmatpush1.bf16.msra.mxu0 %v289
        %309 = vmatprep.subr.bf16.mxu0 0
        %310 = vmatpush1.bf16.msra.mxu0 %v288
        %311 = vmatprep.subr.bf16.mxu0 0
        %312 = vmatpush1.bf16.msra.mxu0 %v287
        %313 = vmatprep.subr.bf16.mxu0 0
        %314 = vmatpush1.bf16.msra.mxu0 %v286
        %315 = vmatprep.subr.bf16.mxu0 0
        %316 = vmatpush1.bf16.msra.mxu0 %v285
        %317 = vmatprep.subr.bf16.mxu0 0
        %318 = vmatpush2.bf16.msra.mxu0 0
        %319 = vmatprep.subr.bf16.mxu0 0
        %320 = vmatpush2.bf16.msra.mxu0 0
        %321 = vmatprep.subr.bf16.mxu0 0
        %322 = vmatpush2.bf16.msra.mxu0 0
        %323 = vmatprep.subr.bf16.mxu0 0
        %324 = vmatpush2.bf16.msra.mxu0 0
        %325 = vmatprep.subr.bf16.mxu0 0
        %326 = vmatpush2.bf16.msra.mxu0 0
        %327 = vmatprep.subr.bf16.mxu0 0
        %328 = vmatpush2.bf16.msra.mxu0 0
        %329 = vmatprep.subr.bf16.mxu0 0
        %330 = vmatpush2.bf16.msra.mxu0 0
        %331 = vmatprep.subr.bf16.mxu0 0
        %332 = vmatpush2.bf16.msra.mxu0 0
        %333 = vmatprep.mubr.bf16.mxu0 0
        %334 = vmatmul.mubr.bf16.gmra.mxu0 %v216
        %v335 = vpop.f32.mrf.mxu0
        %v336 = vadd.f32 0.0, %v335
        %v337 = vpop.f32.mrf.mxu0
        %v338 = vpop.f32.mrf.mxu0
        %v339 = vpop.f32.mrf.mxu0
        %340 = vdwg.mxu0
        %v343 = vunpack.c.l.b16 %v218
        %v344 = vunpack.c.l.b16 %v219
        %v345 = vpack.c.b16 %v344, %v343
        %v347 = vshrl.u32 %v345, 16
        %v349 = vrot.slane %v347, 3
        %v350 = vshll.u32 %v345, 16
        %v352 = vrot.slane %v350, 4
        %v353 = vor.u32 %v349, %v352
        %v371 = vunpack.c.l.b16 %v220
        %v372 = vunpack.c.l.b16 %v221
        %v373 = vunpack.c.l.b16 %v222
        %v374 = vunpack.c.l.b16 %v223
        %v375 = vunpack.c.l.b16 %v224
        %v376 = vunpack.c.l.b16 %v225
        %v377 = vunpack.c.l.b16 %v226
        %v378 = vunpack.c.l.b16 %v227
        %v379 = vunpack.c.l.b16 %v228
        %v380 = vunpack.c.l.b16 %v229
        %v381 = vunpack.c.l.b16 %v230
        %v382 = vunpack.c.l.b16 %v231
        %v383 = vunpack.c.l.b16 %v232
        %v384 = vunpack.c.l.b16 %v233
        %v385 = vunpack.c.l.b16 %v234
        %v386 = vunpack.c.l.b16 %v235
        %v387 = vpack.c.b16 %v372, %v371
        %v388 = vpack.c.b16 %v374, %v373
        %v389 = vpack.c.b16 %v376, %v375
        %v390 = vpack.c.b16 %v378, %v377
        %v391 = vpack.c.b16 %v380, %v379
        %v392 = vpack.c.b16 %v382, %v381
        %v393 = vpack.c.b16 %v384, %v383
        %v394 = vpack.c.b16 %v386, %v385
        %403 = vmatprep.subr.bf16.mxu0 0
        %404 = vmatpush1.bf16.msra.mxu0 %v394
        %405 = vmatprep.subr.bf16.mxu0 0
        %406 = vmatpush1.bf16.msra.mxu0 %v393
        %407 = vmatprep.subr.bf16.mxu0 0
        %408 = vmatpush1.bf16.msra.mxu0 %v392
        %409 = vmatprep.subr.bf16.mxu0 0
        %410 = vmatpush1.bf16.msra.mxu0 %v391
        %411 = vmatprep.subr.bf16.mxu0 0
        %412 = vmatpush1.bf16.msra.mxu0 %v390
        %413 = vmatprep.subr.bf16.mxu0 0
        %414 = vmatpush1.bf16.msra.mxu0 %v389
        %415 = vmatprep.subr.bf16.mxu0 0
        %416 = vmatpush1.bf16.msra.mxu0 %v388
        %417 = vmatprep.subr.bf16.mxu0 0
        %418 = vmatpush1.bf16.msra.mxu0 %v387
        %419 = vmatprep.subr.bf16.mxu0 0
        %420 = vmatpush2.bf16.msra.mxu0 0
        %421 = vmatprep.subr.bf16.mxu0 0
        %422 = vmatpush2.bf16.msra.mxu0 0
        %423 = vmatprep.subr.bf16.mxu0 0
        %424 = vmatpush2.bf16.msra.mxu0 0
        %425 = vmatprep.subr.bf16.mxu0 0
        %426 = vmatpush2.bf16.msra.mxu0 0
        %427 = vmatprep.subr.bf16.mxu0 0
        %428 = vmatpush2.bf16.msra.mxu0 0
        %429 = vmatprep.subr.bf16.mxu0 0
        %430 = vmatpush2.bf16.msra.mxu0 0
        %431 = vmatprep.subr.bf16.mxu0 0
        %432 = vmatpush2.bf16.msra.mxu0 0
        %433 = vmatprep.subr.bf16.mxu0 0
        %434 = vmatpush2.bf16.msra.mxu0 0
        %435 = vmatprep.mubr.bf16.mxu0 0
        %436 = vmatmul.mubr.bf16.gmra.mxu0 %v353
        %v437 = vpop.f32.mrf.mxu0
        %v438 = vadd.f32 %v336, %v437
        %v439 = vpop.f32.mrf.mxu0
        %v440 = vpop.f32.mrf.mxu0
        %v441 = vpop.f32.mrf.mxu0
        %442 = vdwg.mxu0
        %v443 = vld [vmem:[#allocation8] sm:$0x1]
        %v444 = vlaneseq
        %v445 = vshrl.u32 %v444, 7
        %v446 = vsub.s32 0, %v445
        %v447 = vrot.slane %v443, %v446
        %v448 = vadd.f32 %v438, %v447
        %vm449 = vcmp.ge.f32.partialorder %v448, 0.0
        %v450 = vmul.f32 %v448, 0.1
        %v451 = vsel %vm449, %v448, %v450
        %v452 = vpack.c.bf16 %v451, %v451
        %453 = vst [vmem:[#allocation2 + $0x8] sm:$0xf] %v452
        %v454 = vld [vmem:[#allocation2 + $0x4] sm:$0x8]
        %v455 = vld [vmem:[#allocation2 + $0x8] sm:$0xf]
        %s456 = scalar_lea.vmem [#allocation6], 128
        %v457 = vld [vmem:[%s456] sm:$0xf]
        %v458 = vld [vmem:[%s456 + $0x4] sm:$0xf]
        %v459 = vld [vmem:[%s456 + $0x8] sm:$0xf]
        %v460 = vld [vmem:[%s456 + $0xc] sm:$0xf]
        %v461 = vld [vmem:[%s456 + $0x10] sm:$0xf]
        %v462 = vld [vmem:[%s456 + $0x14] sm:$0xf]
        %v463 = vld [vmem:[%s456 + $0x18] sm:$0xf]
        %v464 = vld [vmem:[%s456 + $0x1c] sm:$0xf]
        %v465 = vld [vmem:[%s456 + $0x20] sm:$0xf]
        %v466 = vld [vmem:[%s456 + $0x24] sm:$0xf]
        %v467 = vld [vmem:[%s456 + $0x28] sm:$0xf]
        %v468 = vld [vmem:[%s456 + $0x2c] sm:$0xf]
        %v469 = vld [vmem:[%s456 + $0x30] sm:$0xf]
        %v470 = vld [vmem:[%s456 + $0x34] sm:$0xf]
        %v471 = vld [vmem:[%s456 + $0x38] sm:$0xf]
        %v472 = vld [vmem:[%s456 + $0x3c] sm:$0xf]
        %s473 = scalar_lea.vmem [#allocation6], 192
        %v474 = vld [vmem:[%s473] sm:$0xf]
        %v475 = vld [vmem:[%s473 + $0x4] sm:$0xf]
        %v476 = vld [vmem:[%s473 + $0x8] sm:$0xf]
        %v477 = vld [vmem:[%s473 + $0xc] sm:$0xf]
        %v478 = vld [vmem:[%s473 + $0x10] sm:$0xf]
        %v479 = vld [vmem:[%s473 + $0x14] sm:$0xf]
        %v480 = vld [vmem:[%s473 + $0x18] sm:$0xf]
        %v481 = vld [vmem:[%s473 + $0x1c] sm:$0xf]
        %v482 = vld [vmem:[%s473 + $0x20] sm:$0xf]
        %v483 = vld [vmem:[%s473 + $0x24] sm:$0xf]
        %v484 = vld [vmem:[%s473 + $0x28] sm:$0xf]
        %v485 = vld [vmem:[%s473 + $0x2c] sm:$0xf]
        %v486 = vld [vmem:[%s473 + $0x30] sm:$0xf]
        %v487 = vld [vmem:[%s473 + $0x34] sm:$0xf]
        %v488 = vld [vmem:[%s473 + $0x38] sm:$0xf]
        %v489 = vld [vmem:[%s473 + $0x3c] sm:$0xf]
        %v506 = vunpack.c.l.b16 %v474
        %v507 = vunpack.c.l.b16 %v475
        %v508 = vunpack.c.l.b16 %v476
        %v509 = vunpack.c.l.b16 %v477
        %v510 = vunpack.c.l.b16 %v478
        %v511 = vunpack.c.l.b16 %v479
        %v512 = vunpack.c.l.b16 %v480
        %v513 = vunpack.c.l.b16 %v481
        %v514 = vunpack.c.l.b16 %v482
        %v515 = vunpack.c.l.b16 %v483
        %v516 = vunpack.c.l.b16 %v484
        %v517 = vunpack.c.l.b16 %v485
        %v518 = vunpack.c.l.b16 %v486
        %v519 = vunpack.c.l.b16 %v487
        %v520 = vunpack.c.l.b16 %v488
        %v521 = vunpack.c.l.b16 %v489
        %v522 = vpack.c.b16 %v507, %v506
        %v523 = vpack.c.b16 %v509, %v508
        %v524 = vpack.c.b16 %v511, %v510
        %v525 = vpack.c.b16 %v513, %v512
        %v526 = vpack.c.b16 %v515, %v514
        %v527 = vpack.c.b16 %v517, %v516
        %v528 = vpack.c.b16 %v519, %v518
        %v529 = vpack.c.b16 %v521, %v520
        %538 = vmatprep.subr.bf16.mxu0 0
        %539 = vmatpush1.bf16.msra.mxu0 %v529
        %540 = vmatprep.subr.bf16.mxu0 0
        %541 = vmatpush1.bf16.msra.mxu0 %v528
        %542 = vmatprep.subr.bf16.mxu0 0
        %543 = vmatpush1.bf16.msra.mxu0 %v527
        %544 = vmatprep.subr.bf16.mxu0 0
        %545 = vmatpush1.bf16.msra.mxu0 %v526
        %546 = vmatprep.subr.bf16.mxu0 0
        %547 = vmatpush1.bf16.msra.mxu0 %v525
        %548 = vmatprep.subr.bf16.mxu0 0
        %549 = vmatpush1.bf16.msra.mxu0 %v524
        %550 = vmatprep.subr.bf16.mxu0 0
        %551 = vmatpush1.bf16.msra.mxu0 %v523
        %552 = vmatprep.subr.bf16.mxu0 0
        %553 = vmatpush1.bf16.msra.mxu0 %v522
        %554 = vmatprep.subr.bf16.mxu0 0
        %555 = vmatpush2.bf16.msra.mxu0 0
        %556 = vmatprep.subr.bf16.mxu0 0
        %557 = vmatpush2.bf16.msra.mxu0 0
        %558 = vmatprep.subr.bf16.mxu0 0
        %559 = vmatpush2.bf16.msra.mxu0 0
        %560 = vmatprep.subr.bf16.mxu0 0
        %561 = vmatpush2.bf16.msra.mxu0 0
        %562 = vmatprep.subr.bf16.mxu0 0
        %563 = vmatpush2.bf16.msra.mxu0 0
        %564 = vmatprep.subr.bf16.mxu0 0
        %565 = vmatpush2.bf16.msra.mxu0 0
        %566 = vmatprep.subr.bf16.mxu0 0
        %567 = vmatpush2.bf16.msra.mxu0 0
        %568 = vmatprep.subr.bf16.mxu0 0
        %569 = vmatpush2.bf16.msra.mxu0 0
        %570 = vmatprep.mubr.bf16.mxu0 0
        %571 = vmatmul.mubr.bf16.gmra.mxu0 %v452
        %v572 = vpop.f32.mrf.mxu0
        %v573 = vadd.f32 0.0, %v572
        %v574 = vpop.f32.mrf.mxu0
        %v575 = vpop.f32.mrf.mxu0
        %v576 = vpop.f32.mrf.mxu0
        %577 = vdwg.mxu0
        %v580 = vunpack.c.l.b16 %v454
        %v581 = vunpack.c.l.b16 %v455
        %v582 = vpack.c.b16 %v581, %v580
        %v584 = vshrl.u32 %v582, 16
        %v586 = vrot.slane %v584, 3
        %v587 = vshll.u32 %v582, 16
        %v589 = vrot.slane %v587, 4
        %v590 = vor.u32 %v586, %v589
        %v608 = vunpack.c.l.b16 %v457
        %v609 = vunpack.c.l.b16 %v458
        %v610 = vunpack.c.l.b16 %v459
        %v611 = vunpack.c.l.b16 %v460
        %v612 = vunpack.c.l.b16 %v461
        %v613 = vunpack.c.l.b16 %v462
        %v614 = vunpack.c.l.b16 %v463
        %v615 = vunpack.c.l.b16 %v464
        %v616 = vunpack.c.l.b16 %v465
        %v617 = vunpack.c.l.b16 %v466
        %v618 = vunpack.c.l.b16 %v467
        %v619 = vunpack.c.l.b16 %v468
        %v620 = vunpack.c.l.b16 %v469
        %v621 = vunpack.c.l.b16 %v470
        %v622 = vunpack.c.l.b16 %v471
        %v623 = vunpack.c.l.b16 %v472
        %v624 = vpack.c.b16 %v609, %v608
        %v625 = vpack.c.b16 %v611, %v610
        %v626 = vpack.c.b16 %v613, %v612
        %v627 = vpack.c.b16 %v615, %v614
        %v628 = vpack.c.b16 %v617, %v616
        %v629 = vpack.c.b16 %v619, %v618
        %v630 = vpack.c.b16 %v621, %v620
        %v631 = vpack.c.b16 %v623, %v622
        %640 = vmatprep.subr.bf16.mxu0 0
        %641 = vmatpush1.bf16.msra.mxu0 %v631
        %642 = vmatprep.subr.bf16.mxu0 0
        %643 = vmatpush1.bf16.msra.mxu0 %v630
        %644 = vmatprep.subr.bf16.mxu0 0
        %645 = vmatpush1.bf16.msra.mxu0 %v629
        %646 = vmatprep.subr.bf16.mxu0 0
        %647 = vmatpush1.bf16.msra.mxu0 %v628
        %648 = vmatprep.subr.bf16.mxu0 0
        %649 = vmatpush1.bf16.msra.mxu0 %v627
        %650 = vmatprep.subr.bf16.mxu0 0
        %651 = vmatpush1.bf16.msra.mxu0 %v626
        %652 = vmatprep.subr.bf16.mxu0 0
        %653 = vmatpush1.bf16.msra.mxu0 %v625
        %654 = vmatprep.subr.bf16.mxu0 0
        %655 = vmatpush1.bf16.msra.mxu0 %v624
        %656 = vmatprep.subr.bf16.mxu0 0
        %657 = vmatpush2.bf16.msra.mxu0 0
        %658 = vmatprep.subr.bf16.mxu0 0
        %659 = vmatpush2.bf16.msra.mxu0 0
        %660 = vmatprep.subr.bf16.mxu0 0
        %661 = vmatpush2.bf16.msra.mxu0 0
        %662 = vmatprep.subr.bf16.mxu0 0
        %663 = vmatpush2.bf16.msra.mxu0 0
        %664 = vmatprep.subr.bf16.mxu0 0
        %665 = vmatpush2.bf16.msra.mxu0 0
        %666 = vmatprep.subr.bf16.mxu0 0
        %667 = vmatpush2.bf16.msra.mxu0 0
        %668 = vmatprep.subr.bf16.mxu0 0
        %669 = vmatpush2.bf16.msra.mxu0 0
        %670 = vmatprep.subr.bf16.mxu0 0
        %671 = vmatpush2.bf16.msra.mxu0 0
        %672 = vmatprep.mubr.bf16.mxu0 0
        %673 = vmatmul.mubr.bf16.gmra.mxu0 %v590
        %v674 = vpop.f32.mrf.mxu0
        %v675 = vadd.f32 %v573, %v674
        %v676 = vpop.f32.mrf.mxu0
        %v677 = vpop.f32.mrf.mxu0
        %v678 = vpop.f32.mrf.mxu0
        %679 = vdwg.mxu0
        %v680 = vld [vmem:[#allocation8 + $0x1] sm:$0x1]
        %v681 = vlaneseq
        %v682 = vshrl.u32 %v681, 7
        %v683 = vsub.s32 0, %v682
        %v684 = vrot.slane %v680, %v683
        %v685 = vadd.f32 %v675, %v684
        %vm686 = vcmp.ge.f32.partialorder %v685, 0.0
        %v687 = vmul.f32 %v685, 0.1
        %v688 = vsel %vm686, %v685, %v687
        %s689 = scalar_lea.vmem [#allocation6], 256
        %v690 = vld [vmem:[%s689] sm:$0xf]
        %v691 = vld [vmem:[%s689 + $0x4] sm:$0xf]
        %v692 = vld [vmem:[%s689 + $0x8] sm:$0xf]
        %v693 = vld [vmem:[%s689 + $0xc] sm:$0xf]
        %v694 = vld [vmem:[%s689 + $0x10] sm:$0xf]
        %v695 = vld [vmem:[%s689 + $0x14] sm:$0xf]
        %v696 = vld [vmem:[%s689 + $0x18] sm:$0xf]
        %v697 = vld [vmem:[%s689 + $0x1c] sm:$0xf]
        %v698 = vld [vmem:[%s689 + $0x20] sm:$0xf]
        %v699 = vld [vmem:[%s689 + $0x24] sm:$0xf]
        %v700 = vld [vmem:[%s689 + $0x28] sm:$0xf]
        %v701 = vld [vmem:[%s689 + $0x2c] sm:$0xf]
        %v702 = vld [vmem:[%s689 + $0x30] sm:$0xf]
        %v703 = vld [vmem:[%s689 + $0x34] sm:$0xf]
        %v704 = vld [vmem:[%s689 + $0x38] sm:$0xf]
        %v705 = vld [vmem:[%s689 + $0x3c] sm:$0xf]
        %v706 = vld [vmem:[#allocation8 + $0x2] sm:$0x1]
        %v707 = vlaneseq
        %v708 = vshrl.u32 %v707, 7
        %v709 = vsub.s32 0, %v708
        %v710 = vrot.slane %v706, %v709
        %v727 = vunpack.c.l.b16 %v690
        %v728 = vunpack.c.l.b16 %v691
        %v729 = vunpack.c.l.b16 %v692
        %v730 = vunpack.c.l.b16 %v693
        %v731 = vunpack.c.l.b16 %v694
        %v732 = vunpack.c.l.b16 %v695
        %v733 = vunpack.c.l.b16 %v696
        %v734 = vunpack.c.l.b16 %v697
        %v735 = vunpack.c.l.b16 %v698
        %v736 = vunpack.c.l.b16 %v699
        %v737 = vunpack.c.l.b16 %v700
        %v738 = vunpack.c.l.b16 %v701
        %v739 = vunpack.c.l.b16 %v702
        %v740 = vunpack.c.l.b16 %v703
        %v741 = vunpack.c.l.b16 %v704
        %v742 = vunpack.c.l.b16 %v705
        %v743 = vpack.c.b16 %v728, %v727
        %v744 = vpack.c.b16 %v730, %v729
        %v745 = vpack.c.b16 %v732, %v731
        %v746 = vpack.c.b16 %v734, %v733
        %v747 = vpack.c.b16 %v736, %v735
        %v748 = vpack.c.b16 %v738, %v737
        %v749 = vpack.c.b16 %v740, %v739
        %v750 = vpack.c.b16 %v742, %v741
        %759 = vmatprep.subr.bf16.mxu0 0
        %760 = vmatpush1.bf16.msra.mxu0 %v750
        %761 = vmatprep.subr.bf16.mxu0 0
        %762 = vmatpush1.bf16.msra.mxu0 %v749
        %763 = vmatprep.subr.bf16.mxu0 0
        %764 = vmatpush1.bf16.msra.mxu0 %v748
        %765 = vmatprep.subr.bf16.mxu0 0
        %766 = vmatpush1.bf16.msra.mxu0 %v747
        %767 = vmatprep.subr.bf16.mxu0 0
        %768 = vmatpush1.bf16.msra.mxu0 %v746
        %769 = vmatprep.subr.bf16.mxu0 0
        %770 = vmatpush1.bf16.msra.mxu0 %v745
        %771 = vmatprep.subr.bf16.mxu0 0
        %772 = vmatpush1.bf16.msra.mxu0 %v744
        %773 = vmatprep.subr.bf16.mxu0 0
        %774 = vmatpush1.bf16.msra.mxu0 %v743
        %775 = vmatprep.subr.bf16.mxu0 0
        %776 = vmatpush2.bf16.msra.mxu0 0
        %777 = vmatprep.subr.bf16.mxu0 0
        %778 = vmatpush2.bf16.msra.mxu0 0
        %779 = vmatprep.subr.bf16.mxu0 0
        %780 = vmatpush2.bf16.msra.mxu0 0
        %781 = vmatprep.subr.bf16.mxu0 0
        %782 = vmatpush2.bf16.msra.mxu0 0
        %783 = vmatprep.subr.bf16.mxu0 0
        %784 = vmatpush2.bf16.msra.mxu0 0
        %785 = vmatprep.subr.bf16.mxu0 0
        %786 = vmatpush2.bf16.msra.mxu0 0
        %787 = vmatprep.subr.bf16.mxu0 0
        %788 = vmatpush2.bf16.msra.mxu0 0
        %789 = vmatprep.subr.bf16.mxu0 0
        %790 = vmatpush2.bf16.msra.mxu0 0
        %791 = vmatprep.mubr.bf16.mxu0 0
        %792 = vmatmul.mubr.bf16.gmra.mxu0 %v216
        %v793 = vpop.f32.mrf.mxu0
        %v794 = vadd.f32 %v710, %v793
        %v795 = vpop.f32.mrf.mxu0
        %v796 = vpop.f32.mrf.mxu0
        %v797 = vpop.f32.mrf.mxu0
        %798 = vdwg.mxu0
        %v799 = vadd.f32 %v688, %v794
        %vm800 = vcmp.ge.f32.partialorder %v799, 0.0
        %v801 = vmul.f32 %v799, 0.1
        %v802 = vsel %vm800, %v799, %v801
        %v803 = vpack.c.bf16 %v802, %v802
        %804 = vst [vmem:[#allocation2 + $0x8] sm:$0xf] %v803
        %v805 = vld [vmem:[#allocation2 + $0x4] sm:$0x8]
        %v806 = vld [vmem:[#allocation2 + $0x8] sm:$0x7]
        %s807 = scalar_lea.vmem [#allocation6], 320
        %v808 = vld [vmem:[%s807] sm:$0xf]
        %v809 = vld [vmem:[%s807 + $0x4] sm:$0xf]
        %v810 = vld [vmem:[%s807 + $0x8] sm:$0xf]
        %v811 = vld [vmem:[%s807 + $0xc] sm:$0xf]
        %v812 = vld [vmem:[%s807 + $0x10] sm:$0xf]
        %v813 = vld [vmem:[%s807 + $0x14] sm:$0xf]
        %v814 = vld [vmem:[%s807 + $0x18] sm:$0xf]
        %v815 = vld [vmem:[%s807 + $0x1c] sm:$0xf]
        %v816 = vld [vmem:[%s807 + $0x20] sm:$0xf]
        %v817 = vld [vmem:[%s807 + $0x24] sm:$0xf]
        %v818 = vld [vmem:[%s807 + $0x28] sm:$0xf]
        %v819 = vld [vmem:[%s807 + $0x2c] sm:$0xf]
        %v820 = vld [vmem:[%s807 + $0x30] sm:$0xf]
        %v821 = vld [vmem:[%s807 + $0x34] sm:$0xf]
        %v822 = vld [vmem:[%s807 + $0x38] sm:$0xf]
        %v823 = vld [vmem:[%s807 + $0x3c] sm:$0xf]
        %s824 = scalar_lea.vmem [#allocation6], 384
        %v825 = vld [vmem:[%s824] sm:$0xf]
        %v826 = vld [vmem:[%s824 + $0x4] sm:$0xf]
        %v827 = vld [vmem:[%s824 + $0x8] sm:$0xf]
        %v828 = vld [vmem:[%s824 + $0xc] sm:$0xf]
        %v829 = vld [vmem:[%s824 + $0x10] sm:$0xf]
        %v830 = vld [vmem:[%s824 + $0x14] sm:$0xf]
        %v831 = vld [vmem:[%s824 + $0x18] sm:$0xf]
        %v832 = vld [vmem:[%s824 + $0x1c] sm:$0xf]
        %v833 = vld [vmem:[%s824 + $0x20] sm:$0xf]
        %v834 = vld [vmem:[%s824 + $0x24] sm:$0xf]
        %v835 = vld [vmem:[%s824 + $0x28] sm:$0xf]
        %v836 = vld [vmem:[%s824 + $0x2c] sm:$0xf]
        %v837 = vld [vmem:[%s824 + $0x30] sm:$0xf]
        %v838 = vld [vmem:[%s824 + $0x34] sm:$0xf]
        %v839 = vld [vmem:[%s824 + $0x38] sm:$0xf]
        %v840 = vld [vmem:[%s824 + $0x3c] sm:$0xf]
        %v857 = vunpack.c.l.b16 %v825
        %v858 = vunpack.c.l.b16 %v826
        %v859 = vunpack.c.l.b16 %v827
        %v860 = vunpack.c.l.b16 %v828
        %v861 = vunpack.c.l.b16 %v829
        %v862 = vunpack.c.l.b16 %v830
        %v863 = vunpack.c.l.b16 %v831
        %v864 = vunpack.c.l.b16 %v832
        %v865 = vunpack.c.l.b16 %v833
        %v866 = vunpack.c.l.b16 %v834
        %v867 = vunpack.c.l.b16 %v835
        %v868 = vunpack.c.l.b16 %v836
        %v869 = vunpack.c.l.b16 %v837
        %v870 = vunpack.c.l.b16 %v838
        %v871 = vunpack.c.l.b16 %v839
        %v872 = vunpack.c.l.b16 %v840
        %v873 = vpack.c.b16 %v858, %v857
        %v874 = vpack.c.b16 %v860, %v859
        %v875 = vpack.c.b16 %v862, %v861
        %v876 = vpack.c.b16 %v864, %v863
        %v877 = vpack.c.b16 %v866, %v865
        %v878 = vpack.c.b16 %v868, %v867
        %v879 = vpack.c.b16 %v870, %v869
        %v880 = vpack.c.b16 %v872, %v871
        %889 = vmatprep.subr.bf16.mxu0 0
        %890 = vmatpush1.bf16.msra.mxu0 %v880
        %891 = vmatprep.subr.bf16.mxu0 0
        %892 = vmatpush1.bf16.msra.mxu0 %v879
        %893 = vmatprep.subr.bf16.mxu0 0
        %894 = vmatpush1.bf16.msra.mxu0 %v878
        %895 = vmatprep.subr.bf16.mxu0 0
        %896 = vmatpush1.bf16.msra.mxu0 %v877
        %897 = vmatprep.subr.bf16.mxu0 0
        %898 = vmatpush1.bf16.msra.mxu0 %v876
        %899 = vmatprep.subr.bf16.mxu0 0
        %900 = vmatpush1.bf16.msra.mxu0 %v875
        %901 = vmatprep.subr.bf16.mxu0 0
        %902 = vmatpush1.bf16.msra.mxu0 %v874
        %903 = vmatprep.subr.bf16.mxu0 0
        %904 = vmatpush1.bf16.msra.mxu0 %v873
        %905 = vmatprep.subr.bf16.mxu0 0
        %906 = vmatpush2.bf16.msra.mxu0 0
        %907 = vmatprep.subr.bf16.mxu0 0
        %908 = vmatpush2.bf16.msra.mxu0 0
        %909 = vmatprep.subr.bf16.mxu0 0
        %910 = vmatpush2.bf16.msra.mxu0 0
        %911 = vmatprep.subr.bf16.mxu0 0
        %912 = vmatpush2.bf16.msra.mxu0 0
        %913 = vmatprep.subr.bf16.mxu0 0
        %914 = vmatpush2.bf16.msra.mxu0 0
        %915 = vmatprep.subr.bf16.mxu0 0
        %916 = vmatpush2.bf16.msra.mxu0 0
        %917 = vmatprep.subr.bf16.mxu0 0
        %918 = vmatpush2.bf16.msra.mxu0 0
        %919 = vmatprep.subr.bf16.mxu0 0
        %920 = vmatpush2.bf16.msra.mxu0 0
        %921 = vmatprep.mubr.bf16.mxu0 0
        %922 = vmatmul.mubr.bf16.gmra.mxu0 %v803
        %v923 = vpop.f32.mrf.mxu0
        %v924 = vadd.f32 0.0, %v923
        %v925 = vpop.f32.mrf.mxu0
        %v926 = vpop.f32.mrf.mxu0
        %v927 = vpop.f32.mrf.mxu0
        %928 = vdwg.mxu0
        %v931 = vunpack.c.l.b16 %v805
        %v932 = vunpack.c.l.b16 %v806
        %v933 = vpack.c.b16 %v932, %v931
        %v934 = vrot.slane %v933, 3
        %v952 = vunpack.c.l.b16 %v808
        %v953 = vunpack.c.l.b16 %v809
        %v954 = vunpack.c.l.b16 %v810
        %v955 = vunpack.c.l.b16 %v811
        %v956 = vunpack.c.l.b16 %v812
        %v957 = vunpack.c.l.b16 %v813
        %v958 = vunpack.c.l.b16 %v814
        %v959 = vunpack.c.l.b16 %v815
        %v960 = vunpack.c.l.b16 %v816
        %v961 = vunpack.c.l.b16 %v817
        %v962 = vunpack.c.l.b16 %v818
        %v963 = vunpack.c.l.b16 %v819
        %v964 = vunpack.c.l.b16 %v820
        %v965 = vunpack.c.l.b16 %v821
        %v966 = vunpack.c.l.b16 %v822
        %v967 = vunpack.c.l.b16 %v823
        %v968 = vpack.c.b16 %v953, %v952
        %v969 = vpack.c.b16 %v955, %v954
        %v970 = vpack.c.b16 %v957, %v956
        %v971 = vpack.c.b16 %v959, %v958
        %v972 = vpack.c.b16 %v961, %v960
        %v973 = vpack.c.b16 %v963, %v962
        %v974 = vpack.c.b16 %v965, %v964
        %v975 = vpack.c.b16 %v967, %v966
        %984 = vmatprep.subr.bf16.mxu0 0
        %985 = vmatpush1.bf16.msra.mxu0 %v975
        %986 = vmatprep.subr.bf16.mxu0 0
        %987 = vmatpush1.bf16.msra.mxu0 %v974
        %988 = vmatprep.subr.bf16.mxu0 0
        %989 = vmatpush1.bf16.msra.mxu0 %v973
        %990 = vmatprep.subr.bf16.mxu0 0
        %991 = vmatpush1.bf16.msra.mxu0 %v972
        %992 = vmatprep.subr.bf16.mxu0 0
        %993 = vmatpush1.bf16.msra.mxu0 %v971
        %994 = vmatprep.subr.bf16.mxu0 0
        %995 = vmatpush1.bf16.msra.mxu0 %v970
        %996 = vmatprep.subr.bf16.mxu0 0
        %997 = vmatpush1.bf16.msra.mxu0 %v969
        %998 = vmatprep.subr.bf16.mxu0 0
        %999 = vmatpush1.bf16.msra.mxu0 %v968
        %1000 = vmatprep.subr.bf16.mxu0 0
        %1001 = vmatpush2.bf16.msra.mxu0 0
        %1002 = vmatprep.subr.bf16.mxu0 0
        %1003 = vmatpush2.bf16.msra.mxu0 0
        %1004 = vmatprep.subr.bf16.mxu0 0
        %1005 = vmatpush2.bf16.msra.mxu0 0
        %1006 = vmatprep.subr.bf16.mxu0 0
        %1007 = vmatpush2.bf16.msra.mxu0 0
        %1008 = vmatprep.subr.bf16.mxu0 0
        %1009 = vmatpush2.bf16.msra.mxu0 0
        %1010 = vmatprep.subr.bf16.mxu0 0
        %1011 = vmatpush2.bf16.msra.mxu0 0
        %1012 = vmatprep.subr.bf16.mxu0 0
        %1013 = vmatpush2.bf16.msra.mxu0 0
        %1014 = vmatprep.subr.bf16.mxu0 0
        %1015 = vmatpush2.bf16.msra.mxu0 0
        %1016 = vmatprep.mubr.bf16.mxu0 0
        %1017 = vmatmul.mubr.bf16.gmra.mxu0 %v934
        %v1018 = vpop.f32.mrf.mxu0
        %v1019 = vadd.f32 %v924, %v1018
        %v1020 = vpop.f32.mrf.mxu0
        %v1021 = vpop.f32.mrf.mxu0
        %v1022 = vpop.f32.mrf.mxu0
        %1023 = vdwg.mxu0
        %v1024 = vld [vmem:[#allocation8 + $0x3] sm:$0x1]
        %v1025 = vlaneseq
        %v1026 = vshrl.u32 %v1025, 7
        %v1027 = vsub.s32 0, %v1026
        %v1028 = vrot.slane %v1024, %v1027
        %v1029 = vadd.f32 %v1019, %v1028
        %vm1030 = vcmp.ge.f32.partialorder %v1029, 0.0
        %v1031 = vmul.f32 %v1029, 0.1
        %v1032 = vsel %vm1030, %v1029, %v1031
        %v1033 = vpack.c.bf16 %v1032, %v1032
        %1034 = vst [vmem:[#allocation2 + $0x8] sm:$0xf] %v1033
        %v1035 = vld [vmem:[#allocation2 + $0x4] sm:$0x8]
        %v1036 = vld [vmem:[#allocation2 + $0x8] sm:$0x7]
        %s1037 = scalar_lea.vmem [#allocation6], 448
        %v1038 = vld [vmem:[%s1037] sm:$0xf]
        %v1039 = vld [vmem:[%s1037 + $0x4] sm:$0xf]
        %v1040 = vld [vmem:[%s1037 + $0x8] sm:$0xf]
        %v1041 = vld [vmem:[%s1037 + $0xc] sm:$0xf]
        %v1042 = vld [vmem:[%s1037 + $0x10] sm:$0xf]
        %v1043 = vld [vmem:[%s1037 + $0x14] sm:$0xf]
        %v1044 = vld [vmem:[%s1037 + $0x18] sm:$0xf]
        %v1045 = vld [vmem:[%s1037 + $0x1c] sm:$0xf]
        %v1046 = vld [vmem:[%s1037 + $0x20] sm:$0xf]
        %v1047 = vld [vmem:[%s1037 + $0x24] sm:$0xf]
        %v1048 = vld [vmem:[%s1037 + $0x28] sm:$0xf]
        %v1049 = vld [vmem:[%s1037 + $0x2c] sm:$0xf]
        %v1050 = vld [vmem:[%s1037 + $0x30] sm:$0xf]
        %v1051 = vld [vmem:[%s1037 + $0x34] sm:$0xf]
        %v1052 = vld [vmem:[%s1037 + $0x38] sm:$0xf]
        %v1053 = vld [vmem:[%s1037 + $0x3c] sm:$0xf]
        %s1054 = scalar_lea.vmem [#allocation6], 512
        %v1055 = vld [vmem:[%s1054] sm:$0xf]
        %v1056 = vld [vmem:[%s1054 + $0x4] sm:$0xf]
        %v1057 = vld [vmem:[%s1054 + $0x8] sm:$0xf]
        %v1058 = vld [vmem:[%s1054 + $0xc] sm:$0xf]
        %v1059 = vld [vmem:[%s1054 + $0x10] sm:$0xf]
        %v1060 = vld [vmem:[%s1054 + $0x14] sm:$0xf]
        %v1061 = vld [vmem:[%s1054 + $0x18] sm:$0xf]
        %v1062 = vld [vmem:[%s1054 + $0x1c] sm:$0xf]
        %v1063 = vld [vmem:[%s1054 + $0x20] sm:$0xf]
        %v1064 = vld [vmem:[%s1054 + $0x24] sm:$0xf]
        %v1065 = vld [vmem:[%s1054 + $0x28] sm:$0xf]
        %v1066 = vld [vmem:[%s1054 + $0x2c] sm:$0xf]
        %v1067 = vld [vmem:[%s1054 + $0x30] sm:$0xf]
        %v1068 = vld [vmem:[%s1054 + $0x34] sm:$0xf]
        %v1069 = vld [vmem:[%s1054 + $0x38] sm:$0xf]
        %v1070 = vld [vmem:[%s1054 + $0x3c] sm:$0xf]
        %v1087 = vunpack.c.l.b16 %v1055
        %v1088 = vunpack.c.l.b16 %v1056
        %v1089 = vunpack.c.l.b16 %v1057
        %v1090 = vunpack.c.l.b16 %v1058
        %v1091 = vunpack.c.l.b16 %v1059
        %v1092 = vunpack.c.l.b16 %v1060
        %v1093 = vunpack.c.l.b16 %v1061
        %v1094 = vunpack.c.l.b16 %v1062
        %v1095 = vunpack.c.l.b16 %v1063
        %v1096 = vunpack.c.l.b16 %v1064
        %v1097 = vunpack.c.l.b16 %v1065
        %v1098 = vunpack.c.l.b16 %v1066
        %v1099 = vunpack.c.l.b16 %v1067
        %v1100 = vunpack.c.l.b16 %v1068
        %v1101 = vunpack.c.l.b16 %v1069
        %v1102 = vunpack.c.l.b16 %v1070
        %v1103 = vpack.c.b16 %v1088, %v1087
        %v1104 = vpack.c.b16 %v1090, %v1089
        %v1105 = vpack.c.b16 %v1092, %v1091
        %v1106 = vpack.c.b16 %v1094, %v1093
        %v1107 = vpack.c.b16 %v1096, %v1095
        %v1108 = vpack.c.b16 %v1098, %v1097
        %v1109 = vpack.c.b16 %v1100, %v1099
        %v1110 = vpack.c.b16 %v1102, %v1101
        %1119 = vmatprep.subr.bf16.mxu0 0
        %1120 = vmatpush1.bf16.msra.mxu0 %v1110
        %1121 = vmatprep.subr.bf16.mxu0 0
        %1122 = vmatpush1.bf16.msra.mxu0 %v1109
        %1123 = vmatprep.subr.bf16.mxu0 0
        %1124 = vmatpush1.bf16.msra.mxu0 %v1108
        %1125 = vmatprep.subr.bf16.mxu0 0
        %1126 = vmatpush1.bf16.msra.mxu0 %v1107
        %1127 = vmatprep.subr.bf16.mxu0 0
        %1128 = vmatpush1.bf16.msra.mxu0 %v1106
        %1129 = vmatprep.subr.bf16.mxu0 0
        %1130 = vmatpush1.bf16.msra.mxu0 %v1105
        %1131 = vmatprep.subr.bf16.mxu0 0
        %1132 = vmatpush1.bf16.msra.mxu0 %v1104
        %1133 = vmatprep.subr.bf16.mxu0 0
        %1134 = vmatpush1.bf16.msra.mxu0 %v1103
        %1135 = vmatprep.subr.bf16.mxu0 0
        %1136 = vmatpush2.bf16.msra.mxu0 0
        %1137 = vmatprep.subr.bf16.mxu0 0
        %1138 = vmatpush2.bf16.msra.mxu0 0
        %1139 = vmatprep.subr.bf16.mxu0 0
        %1140 = vmatpush2.bf16.msra.mxu0 0
        %1141 = vmatprep.subr.bf16.mxu0 0
        %1142 = vmatpush2.bf16.msra.mxu0 0
        %1143 = vmatprep.subr.bf16.mxu0 0
        %1144 = vmatpush2.bf16.msra.mxu0 0
        %1145 = vmatprep.subr.bf16.mxu0 0
        %1146 = vmatpush2.bf16.msra.mxu0 0
        %1147 = vmatprep.subr.bf16.mxu0 0
        %1148 = vmatpush2.bf16.msra.mxu0 0
        %1149 = vmatprep.subr.bf16.mxu0 0
        %1150 = vmatpush2.bf16.msra.mxu0 0
        %1151 = vmatprep.mubr.bf16.mxu0 0
        %1152 = vmatmul.mubr.bf16.gmra.mxu0 %v1033
        %v1153 = vpop.f32.mrf.mxu0
        %v1154 = vadd.f32 0.0, %v1153
        %v1155 = vpop.f32.mrf.mxu0
        %v1156 = vpop.f32.mrf.mxu0
        %v1157 = vpop.f32.mrf.mxu0
        %1158 = vdwg.mxu0
        %v1161 = vunpack.c.l.b16 %v1035
        %v1162 = vunpack.c.l.b16 %v1036
        %v1163 = vpack.c.b16 %v1162, %v1161
        %v1164 = vrot.slane %v1163, 3
        %v1182 = vunpack.c.l.b16 %v1038
        %v1183 = vunpack.c.l.b16 %v1039
        %v1184 = vunpack.c.l.b16 %v1040
        %v1185 = vunpack.c.l.b16 %v1041
        %v1186 = vunpack.c.l.b16 %v1042
        %v1187 = vunpack.c.l.b16 %v1043
        %v1188 = vunpack.c.l.b16 %v1044
        %v1189 = vunpack.c.l.b16 %v1045
        %v1190 = vunpack.c.l.b16 %v1046
        %v1191 = vunpack.c.l.b16 %v1047
        %v1192 = vunpack.c.l.b16 %v1048
        %v1193 = vunpack.c.l.b16 %v1049
        %v1194 = vunpack.c.l.b16 %v1050
        %v1195 = vunpack.c.l.b16 %v1051
        %v1196 = vunpack.c.l.b16 %v1052
        %v1197 = vunpack.c.l.b16 %v1053
        %v1198 = vpack.c.b16 %v1183, %v1182
        %v1199 = vpack.c.b16 %v1185, %v1184
        %v1200 = vpack.c.b16 %v1187, %v1186
        %v1201 = vpack.c.b16 %v1189, %v1188
        %v1202 = vpack.c.b16 %v1191, %v1190
        %v1203 = vpack.c.b16 %v1193, %v1192
        %v1204 = vpack.c.b16 %v1195, %v1194
        %v1205 = vpack.c.b16 %v1197, %v1196
        %1214 = vmatprep.subr.bf16.mxu0 0
        %1215 = vmatpush1.bf16.msra.mxu0 %v1205
        %1216 = vmatprep.subr.bf16.mxu0 0
        %1217 = vmatpush1.bf16.msra.mxu0 %v1204
        %1218 = vmatprep.subr.bf16.mxu0 0
        %1219 = vmatpush1.bf16.msra.mxu0 %v1203
        %1220 = vmatprep.subr.bf16.mxu0 0
        %1221 = vmatpush1.bf16.msra.mxu0 %v1202
        %1222 = vmatprep.subr.bf16.mxu0 0
        %1223 = vmatpush1.bf16.msra.mxu0 %v1201
        %1224 = vmatprep.subr.bf16.mxu0 0
        %1225 = vmatpush1.bf16.msra.mxu0 %v1200
        %1226 = vmatprep.subr.bf16.mxu0 0
        %1227 = vmatpush1.bf16.msra.mxu0 %v1199
        %1228 = vmatprep.subr.bf16.mxu0 0
        %1229 = vmatpush1.bf16.msra.mxu0 %v1198
        %1230 = vmatprep.subr.bf16.mxu0 0
        %1231 = vmatpush2.bf16.msra.mxu0 0
        %1232 = vmatprep.subr.bf16.mxu0 0
        %1233 = vmatpush2.bf16.msra.mxu0 0
        %1234 = vmatprep.subr.bf16.mxu0 0
        %1235 = vmatpush2.bf16.msra.mxu0 0
        %1236 = vmatprep.subr.bf16.mxu0 0
        %1237 = vmatpush2.bf16.msra.mxu0 0
        %1238 = vmatprep.subr.bf16.mxu0 0
        %1239 = vmatpush2.bf16.msra.mxu0 0
        %1240 = vmatprep.subr.bf16.mxu0 0
        %1241 = vmatpush2.bf16.msra.mxu0 0
        %1242 = vmatprep.subr.bf16.mxu0 0
        %1243 = vmatpush2.bf16.msra.mxu0 0
        %1244 = vmatprep.subr.bf16.mxu0 0
        %1245 = vmatpush2.bf16.msra.mxu0 0
        %1246 = vmatprep.mubr.bf16.mxu0 0
        %1247 = vmatmul.mubr.bf16.gmra.mxu0 %v1164
        %v1248 = vpop.f32.mrf.mxu0
        %v1249 = vadd.f32 %v1154, %v1248
        %v1250 = vpop.f32.mrf.mxu0
        %v1251 = vpop.f32.mrf.mxu0
        %v1252 = vpop.f32.mrf.mxu0
        %1253 = vdwg.mxu0
        %v1254 = vld [vmem:[#allocation8 + $0x4] sm:$0x1]
        %v1255 = vlaneseq
        %v1256 = vshrl.u32 %v1255, 7
        %v1257 = vsub.s32 0, %v1256
        %v1258 = vrot.slane %v1254, %v1257
        %v1259 = vadd.f32 %v1249, %v1258
        %vm1260 = vcmp.ge.f32.partialorder %v1259, 0.0
        %v1261 = vmul.f32 %v1259, 0.1
        %v1262 = vsel %vm1260, %v1259, %v1261
        %v1263 = vadd.f32 %v1262, %v802
        %vm1264 = vcmp.ge.f32.partialorder %v1263, 0.0
        %v1265 = vmul.f32 %v1263, 0.1
        %v1266 = vsel %vm1264, %v1263, %v1265
        %v1267 = vpack.c.bf16 %v1266, %v1266
        %s1268 = scalar_lea.vmem [#allocation6], 576
        %v1269 = vld [vmem:[%s1268] sm:$0xf]
        %v1270 = vld [vmem:[%s1268 + $0x4] sm:$0xf]
        %v1271 = vld [vmem:[%s1268 + $0x8] sm:$0xf]
        %v1272 = vld [vmem:[%s1268 + $0xc] sm:$0xf]
        %v1273 = vld [vmem:[%s1268 + $0x10] sm:$0xf]
        %v1274 = vld [vmem:[%s1268 + $0x14] sm:$0xf]
        %v1275 = vld [vmem:[%s1268 + $0x18] sm:$0xf]
        %v1276 = vld [vmem:[%s1268 + $0x1c] sm:$0xf]
        %v1277 = vld [vmem:[%s1268 + $0x20] sm:$0xf]
        %v1278 = vld [vmem:[%s1268 + $0x24] sm:$0xf]
        %v1279 = vld [vmem:[%s1268 + $0x28] sm:$0xf]
        %v1280 = vld [vmem:[%s1268 + $0x2c] sm:$0xf]
        %v1281 = vld [vmem:[%s1268 + $0x30] sm:$0xf]
        %v1282 = vld [vmem:[%s1268 + $0x34] sm:$0xf]
        %v1283 = vld [vmem:[%s1268 + $0x38] sm:$0xf]
        %v1284 = vld [vmem:[%s1268 + $0x3c] sm:$0xf]
        %v1285 = vld [vmem:[#allocation8 + $0x5] sm:$0x1]
        %v1286 = vlaneseq
        %v1287 = vshrl.u32 %v1286, 7
        %v1288 = vsub.s32 0, %v1287
        %v1289 = vrot.slane %v1285, %v1288
        %v1306 = vunpack.c.l.b16 %v1269
        %v1307 = vunpack.c.l.b16 %v1270
        %v1308 = vunpack.c.l.b16 %v1271
        %v1309 = vunpack.c.l.b16 %v1272
        %v1310 = vunpack.c.l.b16 %v1273
        %v1311 = vunpack.c.l.b16 %v1274
        %v1312 = vunpack.c.l.b16 %v1275
        %v1313 = vunpack.c.l.b16 %v1276
        %v1314 = vunpack.c.l.b16 %v1277
        %v1315 = vunpack.c.l.b16 %v1278
        %v1316 = vunpack.c.l.b16 %v1279
        %v1317 = vunpack.c.l.b16 %v1280
        %v1318 = vunpack.c.l.b16 %v1281
        %v1319 = vunpack.c.l.b16 %v1282
        %v1320 = vunpack.c.l.b16 %v1283
        %v1321 = vunpack.c.l.b16 %v1284
        %v1322 = vpack.c.b16 %v1307, %v1306
        %v1323 = vpack.c.b16 %v1309, %v1308
        %v1324 = vpack.c.b16 %v1311, %v1310
        %v1325 = vpack.c.b16 %v1313, %v1312
        %v1326 = vpack.c.b16 %v1315, %v1314
        %v1327 = vpack.c.b16 %v1317, %v1316
        %v1328 = vpack.c.b16 %v1319, %v1318
        %v1329 = vpack.c.b16 %v1321, %v1320
        %1338 = vmatprep.subr.bf16.mxu0 0
        %1339 = vmatpush1.bf16.msra.mxu0 %v1329
        %1340 = vmatprep.subr.bf16.mxu0 0
        %1341 = vmatpush1.bf16.msra.mxu0 %v1328
        %1342 = vmatprep.subr.bf16.mxu0 0
        %1343 = vmatpush1.bf16.msra.mxu0 %v1327
        %1344 = vmatprep.subr.bf16.mxu0 0
        %1345 = vmatpush1.bf16.msra.mxu0 %v1326
        %1346 = vmatprep.subr.bf16.mxu0 0
        %1347 = vmatpush1.bf16.msra.mxu0 %v1325
        %1348 = vmatprep.subr.bf16.mxu0 0
        %1349 = vmatpush1.bf16.msra.mxu0 %v1324
        %1350 = vmatprep.subr.bf16.mxu0 0
        %1351 = vmatpush1.bf16.msra.mxu0 %v1323
        %1352 = vmatprep.subr.bf16.mxu0 0
        %1353 = vmatpush1.bf16.msra.mxu0 %v1322
        %1354 = vmatprep.subr.bf16.mxu0 0
        %1355 = vmatpush2.bf16.msra.mxu0 0
        %1356 = vmatprep.subr.bf16.mxu0 0
        %1357 = vmatpush2.bf16.msra.mxu0 0
        %1358 = vmatprep.subr.bf16.mxu0 0
        %1359 = vmatpush2.bf16.msra.mxu0 0
        %1360 = vmatprep.subr.bf16.mxu0 0
        %1361 = vmatpush2.bf16.msra.mxu0 0
        %1362 = vmatprep.subr.bf16.mxu0 0
        %1363 = vmatpush2.bf16.msra.mxu0 0
        %1364 = vmatprep.subr.bf16.mxu0 0
        %1365 = vmatpush2.bf16.msra.mxu0 0
        %1366 = vmatprep.subr.bf16.mxu0 0
        %1367 = vmatpush2.bf16.msra.mxu0 0
        %1368 = vmatprep.subr.bf16.mxu0 0
        %1369 = vmatpush2.bf16.msra.mxu0 0
        %1370 = vmatprep.mubr.bf16.mxu0 0
        %1371 = vmatmul.mubr.bf16.gmra.mxu0 %v1267
        %v1372 = vpop.f32.mrf.mxu0
        %v1373 = vadd.f32 %v1289, %v1372
        %v1374 = vpop.f32.mrf.mxu0
        %v1375 = vpop.f32.mrf.mxu0
        %v1376 = vpop.f32.mrf.mxu0
        %1377 = vdwg.mxu0
        %vm1378 = vcmp.ge.f32.partialorder %v1373, 0.0
        %v1379 = vmul.f32 %v1373, 0.1
        %v1380 = vsel %vm1378, %v1373, %v1379
        %v1381 = vpack.c.bf16 %v1380, %v1380
        %s1382 = scalar_lea.vmem [#allocation6], 640
        %v1383 = vld [vmem:[%s1382] sm:$0xf]
        %v1384 = vld [vmem:[%s1382 + $0x4] sm:$0xf]
        %v1385 = vld [vmem:[%s1382 + $0x8] sm:$0xf]
        %v1386 = vld [vmem:[%s1382 + $0xc] sm:$0xf]
        %v1387 = vld [vmem:[%s1382 + $0x10] sm:$0xf]
        %v1388 = vld [vmem:[%s1382 + $0x14] sm:$0xf]
        %v1389 = vld [vmem:[%s1382 + $0x18] sm:$0xf]
        %v1390 = vld [vmem:[%s1382 + $0x1c] sm:$0xf]
        %v1391 = vld [vmem:[%s1382 + $0x20] sm:$0xf]
        %v1392 = vld [vmem:[%s1382 + $0x24] sm:$0xf]
        %v1393 = vld [vmem:[%s1382 + $0x28] sm:$0xf]
        %v1394 = vld [vmem:[%s1382 + $0x2c] sm:$0xf]
        %v1395 = vld [vmem:[%s1382 + $0x30] sm:$0xf]
        %v1396 = vld [vmem:[%s1382 + $0x34] sm:$0xf]
        %v1397 = vld [vmem:[%s1382 + $0x38] sm:$0xf]
        %v1398 = vld [vmem:[%s1382 + $0x3c] sm:$0xf]
        %v1399 = vld [vmem:[#allocation8 + $0x6] sm:$0x1]
        %v1400 = vlaneseq
        %v1401 = vshrl.u32 %v1400, 7
        %v1402 = vsub.s32 0, %v1401
        %v1403 = vrot.slane %v1399, %v1402
        %v1420 = vunpack.c.l.b16 %v1383
        %v1421 = vunpack.c.l.b16 %v1384
        %v1422 = vunpack.c.l.b16 %v1385
        %v1423 = vunpack.c.l.b16 %v1386
        %v1424 = vunpack.c.l.b16 %v1387
        %v1425 = vunpack.c.l.b16 %v1388
        %v1426 = vunpack.c.l.b16 %v1389
        %v1427 = vunpack.c.l.b16 %v1390
        %v1428 = vunpack.c.l.b16 %v1391
        %v1429 = vunpack.c.l.b16 %v1392
        %v1430 = vunpack.c.l.b16 %v1393
        %v1431 = vunpack.c.l.b16 %v1394
        %v1432 = vunpack.c.l.b16 %v1395
        %v1433 = vunpack.c.l.b16 %v1396
        %v1434 = vunpack.c.l.b16 %v1397
        %v1435 = vunpack.c.l.b16 %v1398
        %v1436 = vpack.c.b16 %v1421, %v1420
        %v1437 = vpack.c.b16 %v1423, %v1422
        %v1438 = vpack.c.b16 %v1425, %v1424
        %v1439 = vpack.c.b16 %v1427, %v1426
        %v1440 = vpack.c.b16 %v1429, %v1428
        %v1441 = vpack.c.b16 %v1431, %v1430
        %v1442 = vpack.c.b16 %v1433, %v1432
        %v1443 = vpack.c.b16 %v1435, %v1434
        %1452 = vmatprep.subr.bf16.mxu0 0
        %1453 = vmatpush1.bf16.msra.mxu0 %v1443
        %1454 = vmatprep.subr.bf16.mxu0 0
        %1455 = vmatpush1.bf16.msra.mxu0 %v1442
        %1456 = vmatprep.subr.bf16.mxu0 0
        %1457 = vmatpush1.bf16.msra.mxu0 %v1441
        %1458 = vmatprep.subr.bf16.mxu0 0
        %1459 = vmatpush1.bf16.msra.mxu0 %v1440
        %1460 = vmatprep.subr.bf16.mxu0 0
        %1461 = vmatpush1.bf16.msra.mxu0 %v1439
        %1462 = vmatprep.subr.bf16.mxu0 0
        %1463 = vmatpush1.bf16.msra.mxu0 %v1438
        %1464 = vmatprep.subr.bf16.mxu0 0
        %1465 = vmatpush1.bf16.msra.mxu0 %v1437
        %1466 = vmatprep.subr.bf16.mxu0 0
        %1467 = vmatpush1.bf16.msra.mxu0 %v1436
        %1468 = vmatprep.subr.bf16.mxu0 0
        %1469 = vmatpush2.bf16.msra.mxu0 0
        %1470 = vmatprep.subr.bf16.mxu0 0
        %1471 = vmatpush2.bf16.msra.mxu0 0
        %1472 = vmatprep.subr.bf16.mxu0 0
        %1473 = vmatpush2.bf16.msra.mxu0 0
        %1474 = vmatprep.subr.bf16.mxu0 0
        %1475 = vmatpush2.bf16.msra.mxu0 0
        %1476 = vmatprep.subr.bf16.mxu0 0
        %1477 = vmatpush2.bf16.msra.mxu0 0
        %1478 = vmatprep.subr.bf16.mxu0 0
        %1479 = vmatpush2.bf16.msra.mxu0 0
        %1480 = vmatprep.subr.bf16.mxu0 0
        %1481 = vmatpush2.bf16.msra.mxu0 0
        %1482 = vmatprep.subr.bf16.mxu0 0
        %1483 = vmatpush2.bf16.msra.mxu0 0
        %1484 = vmatprep.mubr.bf16.mxu0 0
        %1485 = vmatmul.mubr.bf16.gmra.mxu0 %v1381
        %v1486 = vpop.f32.mrf.mxu0
        %v1487 = vadd.f32 %v1403, %v1486
        %v1488 = vpop.f32.mrf.mxu0
        %v1489 = vpop.f32.mrf.mxu0
        %v1490 = vpop.f32.mrf.mxu0
        %1491 = vdwg.mxu0
        %vm1492 = vcmp.ge.f32.partialorder %v1487, 0.0
        %v1493 = vmul.f32 %v1487, 0.1
        %v1494 = vsel %vm1492, %v1487, %v1493
        %v1495 = vpack.c.bf16 %v1494, %v1494
        %s1496 = scalar_lea.vmem [#allocation6], 704
        %v1497 = vld [vmem:[%s1496] sm:$0xf]
        %v1498 = vld [vmem:[%s1496 + $0x4] sm:$0xf]
        %v1499 = vld [vmem:[%s1496 + $0x8] sm:$0xf]
        %v1500 = vld [vmem:[%s1496 + $0xc] sm:$0xf]
        %v1501 = vld [vmem:[%s1496 + $0x10] sm:$0xf]
        %v1502 = vld [vmem:[%s1496 + $0x14] sm:$0xf]
        %v1503 = vld [vmem:[%s1496 + $0x18] sm:$0xf]
        %v1504 = vld [vmem:[%s1496 + $0x1c] sm:$0xf]
        %v1505 = vld [vmem:[%s1496 + $0x20] sm:$0xf]
        %v1506 = vld [vmem:[%s1496 + $0x24] sm:$0xf]
        %v1507 = vld [vmem:[%s1496 + $0x28] sm:$0xf]
        %v1508 = vld [vmem:[%s1496 + $0x2c] sm:$0xf]
        %v1509 = vld [vmem:[%s1496 + $0x30] sm:$0xf]
        %v1510 = vld [vmem:[%s1496 + $0x34] sm:$0xf]
        %v1511 = vld [vmem:[%s1496 + $0x38] sm:$0xf]
        %v1512 = vld [vmem:[%s1496 + $0x3c] sm:$0xf]
        %v1513 = vld [vmem:[#allocation8 + $0x7] sm:$0x1]
        %v1514 = vlaneseq
        %v1515 = vshrl.u32 %v1514, 7
        %v1516 = vsub.s32 0, %v1515
        %v1517 = vrot.slane %v1513, %v1516
        %v1534 = vunpack.c.l.b16 %v1497
        %v1535 = vunpack.c.l.b16 %v1498
        %v1536 = vunpack.c.l.b16 %v1499
        %v1537 = vunpack.c.l.b16 %v1500
        %v1538 = vunpack.c.l.b16 %v1501
        %v1539 = vunpack.c.l.b16 %v1502
        %v1540 = vunpack.c.l.b16 %v1503
        %v1541 = vunpack.c.l.b16 %v1504
        %v1542 = vunpack.c.l.b16 %v1505
        %v1543 = vunpack.c.l.b16 %v1506
        %v1544 = vunpack.c.l.b16 %v1507
        %v1545 = vunpack.c.l.b16 %v1508
        %v1546 = vunpack.c.l.b16 %v1509
        %v1547 = vunpack.c.l.b16 %v1510
        %v1548 = vunpack.c.l.b16 %v1511
        %v1549 = vunpack.c.l.b16 %v1512
        %v1550 = vpack.c.b16 %v1535, %v1534
        %v1551 = vpack.c.b16 %v1537, %v1536
        %v1552 = vpack.c.b16 %v1539, %v1538
        %v1553 = vpack.c.b16 %v1541, %v1540
        %v1554 = vpack.c.b16 %v1543, %v1542
        %v1555 = vpack.c.b16 %v1545, %v1544
        %v1556 = vpack.c.b16 %v1547, %v1546
        %v1557 = vpack.c.b16 %v1549, %v1548
        %1566 = vmatprep.subr.bf16.mxu0 0
        %1567 = vmatpush1.bf16.msra.mxu0 %v1557
        %1568 = vmatprep.subr.bf16.mxu0 0
        %1569 = vmatpush1.bf16.msra.mxu0 %v1556
        %1570 = vmatprep.subr.bf16.mxu0 0
        %1571 = vmatpush1.bf16.msra.mxu0 %v1555
        %1572 = vmatprep.subr.bf16.mxu0 0
        %1573 = vmatpush1.bf16.msra.mxu0 %v1554
        %1574 = vmatprep.subr.bf16.mxu0 0
        %1575 = vmatpush1.bf16.msra.mxu0 %v1553
        %1576 = vmatprep.subr.bf16.mxu0 0
        %1577 = vmatpush1.bf16.msra.mxu0 %v1552
        %1578 = vmatprep.subr.bf16.mxu0 0
        %1579 = vmatpush1.bf16.msra.mxu0 %v1551
        %1580 = vmatprep.subr.bf16.mxu0 0
        %1581 = vmatpush1.bf16.msra.mxu0 %v1550
        %1582 = vmatprep.subr.bf16.mxu0 0
        %1583 = vmatpush2.bf16.msra.mxu0 0
        %1584 = vmatprep.subr.bf16.mxu0 0
        %1585 = vmatpush2.bf16.msra.mxu0 0
        %1586 = vmatprep.subr.bf16.mxu0 0
        %1587 = vmatpush2.bf16.msra.mxu0 0
        %1588 = vmatprep.subr.bf16.mxu0 0
        %1589 = vmatpush2.bf16.msra.mxu0 0
        %1590 = vmatprep.subr.bf16.mxu0 0
        %1591 = vmatpush2.bf16.msra.mxu0 0
        %1592 = vmatprep.subr.bf16.mxu0 0
        %1593 = vmatpush2.bf16.msra.mxu0 0
        %1594 = vmatprep.subr.bf16.mxu0 0
        %1595 = vmatpush2.bf16.msra.mxu0 0
        %1596 = vmatprep.subr.bf16.mxu0 0
        %1597 = vmatpush2.bf16.msra.mxu0 0
        %1598 = vmatprep.mubr.bf16.mxu0 0
        %1599 = vmatmul.mubr.bf16.gmra.mxu0 %v1495
        %v1600 = vpop.f32.mrf.mxu0
        %v1601 = vadd.f32 %v1517, %v1600
        %v1602 = vpop.f32.mrf.mxu0
        %v1603 = vpop.f32.mrf.mxu0
        %v1604 = vpop.f32.mrf.mxu0
        %1605 = vdwg.mxu0
        %1606 = vst [vmem:[%s212] sm:$0xff] %v1601
        %s1607 = sand.u32 %s97, 1
        %s1608 = scalar_lea.sflag [#allocation5], %s1607
        %s1609 = sand.u32 %s97, 1
        %s1610 = smul.addr %s1609, 8
        %s1611 = scalar_lea.vmem [#allocation9], %s1610
        // Predicated region
        $region45: #{tpu_custom_call.1} parent=31 // pred_check
          %p1612 = pneg %p107
        $region46: #{tpu_custom_call.1} parent=31 // pred_check_branch
          %1614 = sbr.rel (%p1612) target = $region48
        $region47: #{tpu_custom_call.1} parent=31 // pred_region
          %s1616 = ssub.s32 128, 128
          %1617 = vsyncadd %s1608, %s1616
          %s1618 = smul.addr %s21, 128
          %s1619 = scalar_lea.hbm %s3, %s1618
          %s1621 = sshll.u32 %s1611, 4
          %s1622 = int_to_ptr.vmem [resolvable:$true] %s1621
          %1624 = dma.vmem_to_hbm [thread:$0]  %s1622, 128, %s1619, %s1608
        $region48: #{tpu_custom_call.1} parent=31 // pred_fallthru
          _
      $region32: #{tpu_custom_call.1} parent=5 // pred_fallthru
        _
      %p1625 = scmp.le.s32.totalorder 2, %s16
      // Predicated region
      $region49: #{tpu_custom_call.1} parent=5 // pred_check
        %p1626 = pneg %p1625
      $region50: #{tpu_custom_call.1} parent=5 // pred_check_branch
        %1628 = sbr.rel (%p1626) target = $region52
      $region51: #{tpu_custom_call.1} parent=5 // pred_region
        %s1629 = ssub.s32 %s16, 2
        // Predicated region
        $region53: #{tpu_custom_call.1} parent=51 // pred_check
          %p1630 = pneg %p113
        $region54: #{tpu_custom_call.1} parent=51 // pred_check_branch
          %1632 = sbr.rel (%p1630) target = $region56
        $region55: #{tpu_custom_call.1} parent=51 // pred_region
          %s1633 = sand.u32 %s98, 1
          %s1634 = scalar_lea.sflag [#allocation5], %s1633
          %s1635 = sand.u32 %s98, 1
          %s1636 = smul.addr %s1635, 8
          %s1637 = scalar_lea.vmem [#allocation9], %s1636
          %1638 = dma.done %s1634, 128
        $region56: #{tpu_custom_call.1} parent=51 // pred_fallthru
          _
      $region52: #{tpu_custom_call.1} parent=5 // pred_fallthru
        _
    $region6: #{tpu_custom_call.1} parent=1 // loop_footer
      %s20 = sadd.s32 1, %s16
    $region7: #{tpu_custom_call.1} parent=1 // loop_footer_branch
      %15 = sbr.rel target = $region3
    $region8: #{tpu_custom_call.1} parent=1 // loop_exit
      _
    %1639 = vsyncpa [#allocation4], 1
    %s1640 = scalar_lea.sflag [#allocation4], 1
    %1641 = vsyncpa %s1640, 1
    %1642 = vsyncpa [#allocation7], 1
    %1643 = vsyncpa [#allocation5], 1
    %s1644 = scalar_lea.sflag [#allocation5], 1
    %1645 = vsyncpa %s1644, 1

</llo_original>
